<compile_context>
chip_gen: v7x
topology: tpu7x:2x2x1
jax: 0.10.0
libtpu: 0.0.40
codegen_flags: <defaults>
</compile_context>

<pallas_src>
import math

import jax
import jax.numpy as jnp
import numpy as np
from jax.experimental import pallas as pl
from jax.experimental.pallas import tpu as pltpu


def _pick_tile(dim, candidates=(512, 256, 128)):
    """Largest candidate <= dim (grid uses pl.cdiv; edge blocks are masked on
    write), falling back to the full extent only for small dims (toy config)."""
    for c in candidates:
        if c <= dim:
            return c
    return dim


def _pick_div_tile(dim, candidates=(512, 256, 128)):
    """Largest candidate that exactly divides dim.  Required for the reduction
    (K) axis: a partial K tile would feed garbage into the accumulator."""
    for c in candidates:
        if c <= dim and dim % c == 0:
            return c
    return dim


# ---------------------------------------------------------------------------
# Fused LayerNorm + linear:  out = act(layer_norm(x) @ w + b)
# ---------------------------------------------------------------------------
def pallas_ln_linear(x2d, gamma, beta, w, b, activation=None, eps=1e-5):
    M, K = x2d.shape
    N = w.shape[1]
    tm = _pick_tile(M)
    tn = _pick_tile(N)
    grid = (pl.cdiv(M, tm), pl.cdiv(N, tn))

    def kernel(x_ref, g_ref, beta_ref, w_ref, bias_ref, o_ref):
        # LayerNorm prologue on the (tm, K) tile (fp32 statistics).  This is
        # recomputed per N-tile: cheap VPU work vs. an extra HBM pass of x.
        x = x_ref[...].astype(jnp.float32)
        mu = jnp.mean(x, axis=-1, keepdims=True)
        xc = x - mu
        var = jnp.mean(xc * xc, axis=-1, keepdims=True)
        xn = (xc * jax.lax.rsqrt(var + eps) * g_ref[...].astype(jnp.float32)
              + beta_ref[...].astype(jnp.float32))
        out = jnp.dot(xn, w_ref[...].astype(jnp.float32),
                      preferred_element_type=jnp.float32)
        out = out + bias_ref[...].astype(jnp.float32)
        if activation == "gelu":
            # TODO(synk): PyTorch nn.GELU() is exact (erf); tanh approximation is
            # used here for guaranteed Mosaic lowering (max diff ~1e-3).
            out = jax.nn.gelu(out, approximate=True)
        o_ref[...] = out.astype(o_ref.dtype)

    return pl.pallas_call(
        kernel,
        out_shape=jax.ShapeDtypeStruct((M, N), x2d.dtype),
        grid=grid,
        in_specs=[
            pl.BlockSpec((tm, K), lambda i, j: (i, 0)),
            pl.BlockSpec((1, K), lambda i, j: (0, 0)),
            pl.BlockSpec((1, K), lambda i, j: (0, 0)),
            pl.BlockSpec((K, tn), lambda i, j: (0, j)),
            pl.BlockSpec((1, tn), lambda i, j: (0, j)),
        ],
        out_specs=pl.BlockSpec((tm, tn), lambda i, j: (i, j)),
        compiler_params=pltpu.CompilerParams(
            dimension_semantics=("parallel", "parallel")),
    )(x2d, gamma.reshape(1, K), beta.reshape(1, K), w, b.reshape(1, N))


# ---------------------------------------------------------------------------
# Tiled linear:  out = act(x @ w + b) [+ residual]
# ---------------------------------------------------------------------------
def pallas_linear(x2d, w, b, residual=None, activation=None):
    M, K = x2d.shape
    N = w.shape[1]
    tm = _pick_tile(M)
    tn = _pick_tile(N)
    tk = _pick_div_tile(K)
    grid = (pl.cdiv(M, tm), pl.cdiv(N, tn), K // tk)
    has_res = residual is not None

    def kernel(x_ref, w_ref, b_ref, *rest):
        if has_res:
            r_ref, o_ref, acc_ref = rest
        else:
            o_ref, acc_ref = rest

        @pl.when(pl.program_id(2) == 0)
        def _():
            acc_ref[...] = jnp.zeros_like(acc_ref)

        acc_ref[...] += jnp.dot(x_ref[...], w_ref[...],
                                preferred_element_type=jnp.float32)

        @pl.when(pl.program_id(2) == pl.num_programs(2) - 1)
        def _():
            out = acc_ref[...] + b_ref[...].astype(jnp.float32)
            if activation == "gelu":
                out = jax.nn.gelu(out, approximate=True)
            if has_res:
                out = out + r_ref[...].astype(jnp.float32)
            o_ref[...] = out.astype(o_ref.dtype)

    in_specs = [
        pl.BlockSpec((tm, tk), lambda i, j, k: (i, k)),
        pl.BlockSpec((tk, tn), lambda i, j, k: (k, j)),
        pl.BlockSpec((1, tn), lambda i, j, k: (0, j)),
    ]
    args = [x2d, w, b.reshape(1, N)]
    if has_res:
        in_specs.append(pl.BlockSpec((tm, tn), lambda i, j, k: (i, j)))
        args.append(residual)

    return pl.pallas_call(
        kernel,
        out_shape=jax.ShapeDtypeStruct((M, N), x2d.dtype),
        grid=grid,
        in_specs=in_specs,
        out_specs=pl.BlockSpec((tm, tn), lambda i, j, k: (i, j)),
        scratch_shapes=[pltpu.VMEM((tm, tn), jnp.float32)],
        compiler_params=pltpu.CompilerParams(
            dimension_semantics=("parallel", "parallel", "arbitrary")),
    )(*args)


# ---------------------------------------------------------------------------
# Windowed causal attention + output projection + residual, fused.
#   out = x_res + (windowed_attn(qkv) @ w_proj + b_proj)       (B, T, C)
# ---------------------------------------------------------------------------
def pallas_windowed_attention_proj(qkv, x_res, w_proj, b_proj, n_head, window_size):
    B, T, C3 = qkv.shape
    C = C3 // 3
    W = window_size
    nw = pl.cdiv(T, W)           # ragged last window handled in-kernel
    hd = C // n_head
    scale = 1.0 / math.sqrt(hd)

    def kernel(qkv_ref, x_ref, wp_ref, bp_ref, o_ref):
        base = pl.program_id(1) * W
        row = base + jax.lax.broadcasted_iota(jnp.int32, (W, W), 0)   # global q pos
        col = base + jax.lax.broadcasted_iota(jnp.int32, (W, W), 1)   # global k pos
        valid = (col <= row) & (col < T)        # causal + ragged-tail key mask
        kv_ok = (base + jax.lax.broadcasted_iota(jnp.int32, (W, 1), 0)) < T

        # init accumulator with bias + residual; per-head projection partials
        # accumulate on top (y @ Wp == sum_h y_h @ Wp[h*hd:(h+1)*hd, :]).
        acc = bp_ref[...].astype(jnp.float32) + x_ref[0].astype(jnp.float32)

        # TODO(synk): for production hd >= 128 move the head loop onto the grid
        # (clean per-head BlockSpec DMAs); for small hd the in-kernel slices win.
        for h in range(n_head):                                   # static unroll
            qh = qkv_ref[0, :, h * hd:(h + 1) * hd].astype(jnp.float32) * scale
            kh = qkv_ref[0, :, C + h * hd:C + (h + 1) * hd].astype(jnp.float32)
            vh = qkv_ref[0, :, 2 * C + h * hd:2 * C + (h + 1) * hd].astype(jnp.float32)
            vh = jnp.where(kv_ok, vh, 0.0)      # zero garbage rows of a partial window
            # q @ k^T without materializing a transpose (contract last dims).
            s = jax.lax.dot_general(qh, kh, (((1,), (1,)), ((), ())),
                                    preferred_element_type=jnp.float32)
            s = jnp.where(valid, s, -1e30)
            mx = jnp.max(s, axis=-1, keepdims=True)
            p = jnp.exp(s - mx)
            l = jnp.sum(p, axis=-1, keepdims=True)
            p = p * pl.reciprocal(l, approx=True)                  # EUP vrcp (free slot)
            yh = jnp.dot(p, vh, preferred_element_type=jnp.float32)        # (W, hd)
            acc = acc + jnp.dot(yh, wp_ref[h * hd:(h + 1) * hd, :].astype(jnp.float32),
                                preferred_element_type=jnp.float32)
        # single lane-dense (W, C) store; rows >= T are masked out by Pallas.
        o_ref[0] = acc.astype(o_ref.dtype)

    return pl.pallas_call(
        kernel,
        out_shape=jax.ShapeDtypeStruct((B, T, C), qkv.dtype),
        grid=(B, nw),
        in_specs=[
            pl.BlockSpec((1, W, C3), lambda b, w: (b, w, 0)),
            pl.BlockSpec((1, W, C), lambda b, w: (b, w, 0)),
            pl.BlockSpec((C, C), lambda b, w: (0, 0)),    # w_proj resident in VMEM
            pl.BlockSpec((1, C), lambda b, w: (0, 0)),
        ],
        out_specs=pl.BlockSpec((1, W, C), lambda b, w: (b, w, 0)),
        compiler_params=pltpu.CompilerParams(
            dimension_semantics=("parallel", "parallel")),
    )(qkv, x_res, w_proj, b_proj.reshape(1, C))


# ---------------------------------------------------------------------------
# Full Block forward
# ---------------------------------------------------------------------------
def block_forward(x, p, n_head, window_size):
    B, T, C = x.shape
    x2d = x.reshape(B * T, C)

    # x + c_proj(attn(ln_1(x)))  -- LN fused into QKV matmul; proj + residual
    # fused into the attention kernel (attn intermediate never hits HBM).
    qkv = pallas_ln_linear(x2d, p["ln1_g"], p["ln1_b"], p["w_attn"], p["b_attn"])
    x1 = pallas_windowed_attention_proj(
        qkv.reshape(B, T, 3 * C), x, p["w_proj"], p["b_proj"], n_head, window_size)

    # x1 + mlp(ln_2(x1))  -- LN fused into the FC matmul; residual fused into
    # the output-projection epilogue.
    x1_2d = x1.reshape(B * T, C)
    hid = pallas_ln_linear(x1_2d, p["ln2_g"], p["ln2_b"], p["w_fc"], p["b_fc"],
                           activation="gelu")
    out = pallas_linear(hid, p["w_fc_proj"], p["b_fc_proj"], residual=x1_2d)
    # TODO(synk): attn_dropout / resid_dropout / MLP dropout are identity (dropout=0, eval).
    return out.reshape(B, T, C)


# ---------------------------------------------------------------------------
# Pure-JAX reference mirroring the PyTorch Block forward (eval mode)
# ---------------------------------------------------------------------------
def ref_block_forward(x, p, H, W):
    B, T, C = x.shape
    hd = C // H

    def ln(t, g, b):
        mu = jnp.mean(t, axis=-1, keepdims=True)
        var = jnp.mean((t - mu) ** 2, axis=-1, keepdims=True)
        return (t - mu) * jax.lax.rsqrt(var + 1e-5) * g + b

    h = ln(x, p["ln1_g"], p["ln1_b"])
    qkv = h @ p["w_attn"] + p["b_attn"]
    q, k, v = jnp.split(qkv, 3, axis=-1)

    def split_heads(t):
        return t.reshape(B, T, H, hd).transpose(0, 2, 1, 3)

    q, k, v = map(split_heads, (q, k, v))
    T_pad = (T + W - 1) // W * W
    pad = T_pad - T
    spec = ((0, 0), (0, 0), (0, pad), (0, 0))
    q, k, v = (jnp.pad(t, spec) for t in (q, k, v))
    nw = T_pad // W
    q = q.reshape(B, H, nw, W, hd)
    k = k.reshape(B, H, nw, W, hd)
    v = v.reshape(B, H, nw, W, hd)
    s = jnp.einsum("bhnqd,bhnkd->bhnqk", q, k) / math.sqrt(hd)
    causal = jnp.tril(jnp.ones((W, W), dtype=bool))
    s = jnp.where(causal, s, -1e30)
    pr = jax.nn.softmax(s, axis=-1)
    o = jnp.einsum("bhnqk,bhnkd->bhnqd", pr, v)
    y = o.reshape(B, H, T_pad, hd)[:, :, :T, :].transpose(0, 2, 1, 3).reshape(B, T, C)
    x1 = x + (y @ p["w_proj"] + p["b_proj"])
    h2 = ln(x1, p["ln2_g"], p["ln2_b"])
    m = jax.nn.gelu(h2 @ p["w_fc"] + p["b_fc"], approximate=False)   # PyTorch exact GELU
    return x1 + (m @ p["w_fc_proj"] + p["b_fc_proj"])


# ---------------------------------------------------------------------------
if __name__ == "__main__":
    # Config: n_embd=32, n_head=4, window_size=8, bias=True, dropout=0 (eval).
    B, T, C = 2, 12, 32          # T=12 exercises the ragged last window (W=8)
    H, W = 4, 8

    key = jax.random.PRNGKey(0)
    ks = jax.random.split(key, 13)
    x = jax.random.normal(ks[0], (B, T, C), dtype=jnp.float32)
    # Weights stored as (in, out) (i.e. PyTorch weight transposed).
    p = {
        "ln1_g": 1.0 + 0.1 * jax.random.normal(ks[1], (C,), jnp.float32),
        "ln1_b": 0.1 * jax.random.normal(ks[2], (C,), jnp.float32),
        "w_attn": 0.02 * jax.random.normal(ks[3], (C, 3 * C), jnp.float32),
        "b_attn": 0.02 * jax.random.normal(ks[4], (3 * C,), jnp.float32),
        "w_proj": 0.02 * jax.random.normal(ks[5], (C, C), jnp.float32),
        "b_proj": 0.02 * jax.random.normal(ks[6], (C,), jnp.float32),
        "ln2_g": 1.0 + 0.1 * jax.random.normal(ks[7], (C,), jnp.float32),
        "ln2_b": 0.1 * jax.random.normal(ks[8], (C,), jnp.float32),
        "w_fc": 0.02 * jax.random.normal(ks[9], (C, 4 * C), jnp.float32),
        "b_fc": 0.02 * jax.random.normal(ks[10], (4 * C,), jnp.float32),
        "w_fc_proj": 0.02 * jax.random.normal(ks[11], (4 * C, C), jnp.float32),
        "b_fc_proj": 0.02 * jax.random.normal(ks[12], (C,), jnp.float32),
    }

    fwd = jax.jit(block_forward, static_argnames=("n_head", "window_size"))
    out = jax.block_until_ready(fwd(x, p, n_head=H, window_size=W))

    ref = ref_block_forward(x, p, H, W)
    np.testing.assert_allclose(np.asarray(out), np.asarray(ref), rtol=2e-2, atol=2e-2)

    print("KERNEL_OK")
</pallas_src>

<mosaic_0001>
module attributes {stable_mosaic.version = 11 : i64} {
  func.func @kernel(%arg0: i32, %arg1: i32, %arg2: memref<24x32xf32, #tpu.memory_space<vmem>>, %arg3: memref<1x32xf32, #tpu.memory_space<vmem>>, %arg4: memref<1x32xf32, #tpu.memory_space<vmem>>, %arg5: memref<32x96xf32, #tpu.memory_space<vmem>>, %arg6: memref<1x96xf32, #tpu.memory_space<vmem>>, %arg7: memref<24x96xf32, #tpu.memory_space<vmem>>) attributes {dimension_semantics = [#tpu.dimension_semantics<parallel>, #tpu.dimension_semantics<parallel>], iteration_bounds = array<i64: 1, 1>, scalar_prefetch = 0 : i64, scratch_operands = 0 : i64, tpu.core_type = #tpu.core_type<tc>, window_params = [{transform_indices = @transform_0, window_bounds = array<i64: 24, 32>}, {pipeline_mode = #tpu.pipeline_mode<synchronous>, transform_indices = @transform_1, window_bounds = array<i64: 1, 32>}, {pipeline_mode = #tpu.pipeline_mode<synchronous>, transform_indices = @transform_2, window_bounds = array<i64: 1, 32>}, {transform_indices = @transform_3, window_bounds = array<i64: 32, 96>}, {transform_indices = @transform_4, window_bounds = array<i64: 1, 96>}, {transform_indices = @transform_5, window_bounds = array<i64: 24, 96>}]} {
    %c0 = arith.constant 0 : index
    %c0_0 = arith.constant 0 : index
    %0 = vector.load %arg2[%c0, %c0_0] : memref<24x32xf32, #tpu.memory_space<vmem>>, vector<24x32xf32>
    %cst = arith.constant dense<0.000000e+00> : vector<24xf32>
    %1 = vector.multi_reduction <add>, %0, %cst [1] : vector<24x32xf32> to vector<24xf32>
    %2 = vector.shape_cast %1 : vector<24xf32> to vector<24x1xf32>
    %cst_1 = arith.constant 3.200000e+01 : f32
    %3 = vector.broadcast %cst_1 : f32 to vector<24x1xf32>
    %4 = arith.divf %2, %3 : vector<24x1xf32>
    %5 = vector.broadcast %4 : vector<24x1xf32> to vector<24x32xf32>
    %6 = arith.subf %0, %5 : vector<24x32xf32>
    %7 = arith.mulf %6, %6 : vector<24x32xf32>
    %cst_2 = arith.constant dense<0.000000e+00> : vector<24xf32>
    %8 = vector.multi_reduction <add>, %7, %cst_2 [1] : vector<24x32xf32> to vector<24xf32>
    %9 = vector.shape_cast %8 : vector<24xf32> to vector<24x1xf32>
    %cst_3 = arith.constant 3.200000e+01 : f32
    %10 = vector.broadcast %cst_3 : f32 to vector<24x1xf32>
    %11 = arith.divf %9, %10 : vector<24x1xf32>
    %cst_4 = arith.constant 9.99999974E-6 : f32
    %12 = vector.broadcast %cst_4 : f32 to vector<24x1xf32>
    %13 = arith.addf %11, %12 : vector<24x1xf32>
    %14 = math.rsqrt %13 : vector<24x1xf32>
    %15 = vector.broadcast %14 : vector<24x1xf32> to vector<24x32xf32>
    %16 = arith.mulf %6, %15 : vector<24x32xf32>
    %c0_5 = arith.constant 0 : index
    %c0_6 = arith.constant 0 : index
    %17 = vector.load %arg3[%c0_5, %c0_6] : memref<1x32xf32, #tpu.memory_space<vmem>>, vector<1x32xf32>
    %18 = vector.broadcast %17 : vector<1x32xf32> to vector<24x32xf32>
    %19 = arith.mulf %16, %18 : vector<24x32xf32>
    %c0_7 = arith.constant 0 : index
    %c0_8 = arith.constant 0 : index
    %20 = vector.load %arg4[%c0_7, %c0_8] : memref<1x32xf32, #tpu.memory_space<vmem>>, vector<1x32xf32>
    %21 = vector.broadcast %20 : vector<1x32xf32> to vector<24x32xf32>
    %22 = arith.addf %19, %21 : vector<24x32xf32>
    %c0_9 = arith.constant 0 : index
    %c0_10 = arith.constant 0 : index
    %23 = vector.load %arg5[%c0_9, %c0_10] : memref<32x96xf32, #tpu.memory_space<vmem>>, vector<32x96xf32>
    %cst_11 = arith.constant dense<0.000000e+00> : vector<24x96xf32>
    %24 = tpu.matmul %22, %23, %cst_11 {dimension_numbers = #tpu.dot_dimension_numbers<[1], [0], [0], [1], [0, 0, 1, 1], [], []>} : vector<24x32xf32>, vector<32x96xf32>, vector<24x96xf32> -> vector<24x96xf32>
    %c0_12 = arith.constant 0 : index
    %c0_13 = arith.constant 0 : index
    %25 = vector.load %arg6[%c0_12, %c0_13] : memref<1x96xf32, #tpu.memory_space<vmem>>, vector<1x96xf32>
    %26 = vector.broadcast %25 : vector<1x96xf32> to vector<24x96xf32>
    %27 = arith.addf %24, %26 : vector<24x96xf32>
    %c0_14 = arith.constant 0 : index
    %c0_15 = arith.constant 0 : index
    %28 = vector.load %arg7[%c0_14, %c0_15] : memref<24x96xf32, #tpu.memory_space<vmem>>, vector<24x96xf32>
    tpu.vector_store %arg7[%c0_14, %c0_15], %27 {strides = array<i32>} : memref<24x96xf32, #tpu.memory_space<vmem>>, vector<24x96xf32>,
    return
  }
  func.func @transform_0(%arg0: i32, %arg1: i32) -> (i32, i32) {
    %c0_i32 = arith.constant 0 : i32
    %c0_i32_0 = arith.constant 0 : i32
    return %arg0, %c0_i32 : i32, i32
  }
  func.func @transform_1(%arg0: i32, %arg1: i32) -> (i32, i32) {
    %c0_i32 = arith.constant 0 : i32
    %c0_i32_0 = arith.constant 0 : i32
    %c0_i32_1 = arith.constant 0 : i32
    return %c0_i32, %c0_i32_0 : i32, i32
  }
  func.func @transform_2(%arg0: i32, %arg1: i32) -> (i32, i32) {
    %c0_i32 = arith.constant 0 : i32
    %c0_i32_0 = arith.constant 0 : i32
    %c0_i32_1 = arith.constant 0 : i32
    return %c0_i32, %c0_i32_0 : i32, i32
  }
  func.func @transform_3(%arg0: i32, %arg1: i32) -> (i32, i32) {
    %c0_i32 = arith.constant 0 : i32
    %c0_i32_0 = arith.constant 0 : i32
    return %c0_i32, %arg1 : i32, i32
  }
  func.func @transform_4(%arg0: i32, %arg1: i32) -> (i32, i32) {
    %c0_i32 = arith.constant 0 : i32
    %c0_i32_0 = arith.constant 0 : i32
    return %c0_i32, %arg1 : i32, i32
  }
  func.func @transform_5(%arg0: i32, %arg1: i32) -> (i32, i32) {
    %c0_i32 = arith.constant 0 : i32
    return %arg0, %arg1 : i32, i32
  }
}

module attributes {stable_mosaic.version = 11 : i64} {
  func.func @kernel(%arg0: i32, %arg1: i32, %arg2: memref<24x32xf32, #tpu.memory_space<vmem>>, %arg3: memref<1x32xf32, #tpu.memory_space<vmem>>, %arg4: memref<1x32xf32, #tpu.memory_space<vmem>>, %arg5: memref<32x128xf32, #tpu.memory_space<vmem>>, %arg6: memref<1x128xf32, #tpu.memory_space<vmem>>, %arg7: memref<24x128xf32, #tpu.memory_space<vmem>>) attributes {dimension_semantics = [#tpu.dimension_semantics<parallel>, #tpu.dimension_semantics<parallel>], iteration_bounds = array<i64: 1, 1>, scalar_prefetch = 0 : i64, scratch_operands = 0 : i64, tpu.core_type = #tpu.core_type<tc>, window_params = [{transform_indices = @transform_0, window_bounds = array<i64: 24, 32>}, {pipeline_mode = #tpu.pipeline_mode<synchronous>, transform_indices = @transform_1, window_bounds = array<i64: 1, 32>}, {pipeline_mode = #tpu.pipeline_mode<synchronous>, transform_indices = @transform_2, window_bounds = array<i64: 1, 32>}, {transform_indices = @transform_3, window_bounds = array<i64: 32, 128>}, {transform_indices = @transform_4, window_bounds = array<i64: 1, 128>}, {transform_indices = @transform_5, window_bounds = array<i64: 24, 128>}]} {
    %c0 = arith.constant 0 : index
    %c0_0 = arith.constant 0 : index
    %0 = vector.load %arg2[%c0, %c0_0] : memref<24x32xf32, #tpu.memory_space<vmem>>, vector<24x32xf32>
    %cst = arith.constant dense<0.000000e+00> : vector<24xf32>
    %1 = vector.multi_reduction <add>, %0, %cst [1] : vector<24x32xf32> to vector<24xf32>
    %2 = vector.shape_cast %1 : vector<24xf32> to vector<24x1xf32>
    %cst_1 = arith.constant 3.200000e+01 : f32
    %3 = vector.broadcast %cst_1 : f32 to vector<24x1xf32>
    %4 = arith.divf %2, %3 : vector<24x1xf32>
    %5 = vector.broadcast %4 : vector<24x1xf32> to vector<24x32xf32>
    %6 = arith.subf %0, %5 : vector<24x32xf32>
    %7 = arith.mulf %6, %6 : vector<24x32xf32>
    %cst_2 = arith.constant dense<0.000000e+00> : vector<24xf32>
    %8 = vector.multi_reduction <add>, %7, %cst_2 [1] : vector<24x32xf32> to vector<24xf32>
    %9 = vector.shape_cast %8 : vector<24xf32> to vector<24x1xf32>
    %cst_3 = arith.constant 3.200000e+01 : f32
    %10 = vector.broadcast %cst_3 : f32 to vector<24x1xf32>
    %11 = arith.divf %9, %10 : vector<24x1xf32>
    %cst_4 = arith.constant 9.99999974E-6 : f32
    %12 = vector.broadcast %cst_4 : f32 to vector<24x1xf32>
    %13 = arith.addf %11, %12 : vector<24x1xf32>
    %14 = math.rsqrt %13 : vector<24x1xf32>
    %15 = vector.broadcast %14 : vector<24x1xf32> to vector<24x32xf32>
    %16 = arith.mulf %6, %15 : vector<24x32xf32>
    %c0_5 = arith.constant 0 : index
    %c0_6 = arith.constant 0 : index
    %17 = vector.load %arg3[%c0_5, %c0_6] : memref<1x32xf32, #tpu.memory_space<vmem>>, vector<1x32xf32>
    %18 = vector.broadcast %17 : vector<1x32xf32> to vector<24x32xf32>
    %19 = arith.mulf %16, %18 : vector<24x32xf32>
    %c0_7 = arith.constant 0 : index
    %c0_8 = arith.constant 0 : index
    %20 = vector.load %arg4[%c0_7, %c0_8] : memref<1x32xf32, #tpu.memory_space<vmem>>, vector<1x32xf32>
    %21 = vector.broadcast %20 : vector<1x32xf32> to vector<24x32xf32>
    %22 = arith.addf %19, %21 : vector<24x32xf32>
    %c0_9 = arith.constant 0 : index
    %c0_10 = arith.constant 0 : index
    %23 = vector.load %arg5[%c0_9, %c0_10] : memref<32x128xf32, #tpu.memory_space<vmem>>, vector<32x128xf32>
    %cst_11 = arith.constant dense<0.000000e+00> : vector<24x128xf32>
    %24 = tpu.matmul %22, %23, %cst_11 {dimension_numbers = #tpu.dot_dimension_numbers<[1], [0], [0], [1], [0, 0, 1, 1], [], []>} : vector<24x32xf32>, vector<32x128xf32>, vector<24x128xf32> -> vector<24x128xf32>
    %c0_12 = arith.constant 0 : index
    %c0_13 = arith.constant 0 : index
    %25 = vector.load %arg6[%c0_12, %c0_13] : memref<1x128xf32, #tpu.memory_space<vmem>>, vector<1x128xf32>
    %26 = vector.broadcast %25 : vector<1x128xf32> to vector<24x128xf32>
    %27 = arith.addf %24, %26 : vector<24x128xf32>
    %28 = arith.mulf %27, %27 : vector<24x128xf32>
    %29 = arith.mulf %27, %28 : vector<24x128xf32>
    %cst_14 = arith.constant 4.471500e-02 : f32
    %30 = vector.broadcast %cst_14 : f32 to vector<24x128xf32>
    %31 = arith.mulf %30, %29 : vector<24x128xf32>
    %32 = arith.addf %27, %31 : vector<24x128xf32>
    %cst_15 = arith.constant 0.797884583 : f32
    %33 = vector.broadcast %cst_15 : f32 to vector<24x128xf32>
    %34 = arith.mulf %33, %32 : vector<24x128xf32>
    %35 = math.tanh %34 : vector<24x128xf32>
    %cst_16 = arith.constant 1.000000e+00 : f32
    %36 = vector.broadcast %cst_16 : f32 to vector<24x128xf32>
    %37 = arith.addf %36, %35 : vector<24x128xf32>
    %cst_17 = arith.constant 5.000000e-01 : f32
    %38 = vector.broadcast %cst_17 : f32 to vector<24x128xf32>
    %39 = arith.mulf %38, %37 : vector<24x128xf32>
    %40 = arith.mulf %27, %39 : vector<24x128xf32>
    %c0_18 = arith.constant 0 : index
    %c0_19 = arith.constant 0 : index
    %41 = vector.load %arg7[%c0_18, %c0_19] : memref<24x128xf32, #tpu.memory_space<vmem>>, vector<24x128xf32>
    tpu.vector_store %arg7[%c0_18, %c0_19], %40 {strides = array<i32>} : memref<24x128xf32, #tpu.memory_space<vmem>>, vector<24x128xf32>,
    return
  }
  func.func @transform_0(%arg0: i32, %arg1: i32) -> (i32, i32) {
    %c0_i32 = arith.constant 0 : i32
    %c0_i32_0 = arith.constant 0 : i32
    return %arg0, %c0_i32 : i32, i32
  }
  func.func @transform_1(%arg0: i32, %arg1: i32) -> (i32, i32) {
    %c0_i32 = arith.constant 0 : i32
    %c0_i32_0 = arith.constant 0 : i32
    %c0_i32_1 = arith.constant 0 : i32
    return %c0_i32, %c0_i32_0 : i32, i32
  }
  func.func @transform_2(%arg0: i32, %arg1: i32) -> (i32, i32) {
    %c0_i32 = arith.constant 0 : i32
    %c0_i32_0 = arith.constant 0 : i32
    %c0_i32_1 = arith.constant 0 : i32
    return %c0_i32, %c0_i32_0 : i32, i32
  }
  func.func @transform_3(%arg0: i32, %arg1: i32) -> (i32, i32) {
    %c0_i32 = arith.constant 0 : i32
    %c0_i32_0 = arith.constant 0 : i32
    return %c0_i32, %arg1 : i32, i32
  }
  func.func @transform_4(%arg0: i32, %arg1: i32) -> (i32, i32) {
    %c0_i32 = arith.constant 0 : i32
    %c0_i32_0 = arith.constant 0 : i32
    return %c0_i32, %arg1 : i32, i32
  }
  func.func @transform_5(%arg0: i32, %arg1: i32) -> (i32, i32) {
    %c0_i32 = arith.constant 0 : i32
    return %arg0, %arg1 : i32, i32
  }
}

module attributes {stable_mosaic.version = 11 : i64} {
  func.func @kernel(%arg0: i32, %arg1: i32, %arg2: memref<1x8x96xf32, #tpu.memory_space<vmem>>, %arg3: memref<1x8x32xf32, #tpu.memory_space<vmem>>, %arg4: memref<32x32xf32, #tpu.memory_space<vmem>>, %arg5: memref<1x32xf32, #tpu.memory_space<vmem>>, %arg6: memref<1x8x32xf32, #tpu.memory_space<vmem>>) attributes {dimension_semantics = [#tpu.dimension_semantics<parallel>, #tpu.dimension_semantics<parallel>], iteration_bounds = array<i64: 2, 2>, scalar_prefetch = 0 : i64, scratch_operands = 0 : i64, tpu.core_type = #tpu.core_type<tc>, window_params = [{transform_indices = @transform_0, window_bounds = array<i64: 1, 8, 96>}, {transform_indices = @transform_1, window_bounds = array<i64: 1, 8, 32>}, {pipeline_mode = #tpu.pipeline_mode<synchronous>, transform_indices = @transform_2, window_bounds = array<i64: 32, 32>}, {pipeline_mode = #tpu.pipeline_mode<synchronous>, transform_indices = @transform_3, window_bounds = array<i64: 1, 32>}, {transform_indices = @transform_4, window_bounds = array<i64: 1, 8, 32>}]} {
    %c8_i32 = arith.constant 8 : i32
    %0 = arith.muli %arg1, %c8_i32 : i32
    %1 = tpu.iota {dimensions = array<i32: 0>} : vector<8x8xi32>
    %2 = vector.broadcast %0 : i32 to vector<8x8xi32>
    %3 = arith.addi %2, %1 : vector<8x8xi32>
    %4 = tpu.iota {dimensions = array<i32: 1>} : vector<8x8xi32>
    %5 = vector.broadcast %0 : i32 to vector<8x8xi32>
    %6 = arith.addi %5, %4 : vector<8x8xi32>
    %7 = arith.cmpi sle, %6, %3 : vector<8x8xi32>
    %c12_i32 = arith.constant 12 : i32
    %8 = vector.broadcast %c12_i32 : i32 to vector<8x8xi32>
    %9 = arith.cmpi slt, %6, %8 : vector<8x8xi32>
    %10 = arith.andi %7, %9 : vector<8x8xi1>
    %11 = tpu.iota {dimensions = array<i32: 0>} : vector<8x1xi32>
    %12 = vector.broadcast %0 : i32 to vector<8x1xi32>
    %13 = arith.addi %12, %11 : vector<8x1xi32>
    %c12_i32_0 = arith.constant 12 : i32
    %14 = vector.broadcast %c12_i32_0 : i32 to vector<8x1xi32>
    %15 = arith.cmpi slt, %13, %14 : vector<8x1xi32>
    %c0 = arith.constant 0 : index
    %c0_1 = arith.constant 0 : index
    %16 = vector.load %arg5[%c0, %c0_1] : memref<1x32xf32, #tpu.memory_space<vmem>>, vector<1x32xf32>
    %c0_2 = arith.constant 0 : index
    %c0_3 = arith.constant 0 : index
    %c0_4 = arith.constant 0 : index
    %17 = vector.load %arg3[%c0_2, %c0_3, %c0_4] : memref<1x8x32xf32, #tpu.memory_space<vmem>>, vector<1x8x32xf32>
    %18 = vector.shape_cast %17 : vector<1x8x32xf32> to vector<8x32xf32>
    %19 = vector.broadcast %16 : vector<1x32xf32> to vector<8x32xf32>
    %20 = arith.addf %19, %18 : vector<8x32xf32>
    %c0_5 = arith.constant 0 : index
    %c0_6 = arith.constant 0 : index
    %c0_7 = arith.constant 0 : index
    %21 = vector.load %arg2[%c0_5, %c0_6, %c0_7] : memref<1x8x96xf32, #tpu.memory_space<vmem>>, vector<1x8x8xf32>
    %22 = vector.shape_cast %21 : vector<1x8x8xf32> to vector<8x8xf32>
    %cst = arith.constant 0.353553385 : f32
    %23 = vector.broadcast %cst : f32 to vector<8x8xf32>
    %24 = arith.mulf %22, %23 : vector<8x8xf32>
    %c0_8 = arith.constant 0 : index
    %c0_9 = arith.constant 0 : index
    %c32 = arith.constant 32 : index
    %25 = vector.load %arg2[%c0_8, %c0_9, %c32] : memref<1x8x96xf32, #tpu.memory_space<vmem>>, vector<1x8x8xf32>
    %26 = vector.shape_cast %25 : vector<1x8x8xf32> to vector<8x8xf32>
    %c0_10 = arith.constant 0 : index
    %c0_11 = arith.constant 0 : index
    %c64 = arith.constant 64 : index
    %27 = vector.load %arg2[%c0_10, %c0_11, %c64] : memref<1x8x96xf32, #tpu.memory_space<vmem>>, vector<1x8x8xf32>
    %28 = vector.shape_cast %27 : vector<1x8x8xf32> to vector<8x8xf32>
    %cst_12 = arith.constant 0.000000e+00 : f32
    %29 = vector.shape_cast %15 : vector<8x1xi1> to vector<8x1xi1>
    %30 = vector.broadcast %29 : vector<8x1xi1> to vector<8x8xi1>
    %31 = vector.broadcast %cst_12 : f32 to vector<8x8xf32>
    %32 = arith.select %30, %28, %31 : vector<8x8xi1>, vector<8x8xf32>
    %cst_13 = arith.constant dense<0.000000e+00> : vector<8x8xf32>
    %33 = tpu.matmul %24, %26, %cst_13 {dimension_numbers = #tpu.dot_dimension_numbers<[1], [1], [0], [0], [0, 0, 1, 0], [], []>} : vector<8x8xf32>, vector<8x8xf32>, vector<8x8xf32> -> vector<8x8xf32>
    %cst_14 = arith.constant -1.000000e+30 : f32
    %34 = vector.broadcast %cst_14 : f32 to vector<8x8xf32>
    %35 = arith.select %10, %33, %34 : vector<8x8xi1>, vector<8x8xf32>
    %cst_15 = arith.constant dense<0xFF800000> : vector<8xf32>
    %36 = vector.multi_reduction <maximumf>, %35, %cst_15 [1] : vector<8x8xf32> to vector<8xf32>
    %37 = vector.shape_cast %36 : vector<8xf32> to vector<8x1xf32>
    %38 = vector.broadcast %37 : vector<8x1xf32> to vector<8x8xf32>
    %39 = arith.subf %35, %38 : vector<8x8xf32>
    %40 = math.exp %39 : vector<8x8xf32>
    %cst_16 = arith.constant dense<0.000000e+00> : vector<8xf32>
    %41 = vector.multi_reduction <add>, %40, %cst_16 [1] : vector<8x8xf32> to vector<8xf32>
    %42 = vector.shape_cast %41 : vector<8xf32> to vector<8x1xf32>
    %43 = tpu.reciprocal %42 {approx = true} : vector<8x1xf32> -> vector<8x1xf32>
    %44 = vector.broadcast %43 : vector<8x1xf32> to vector<8x8xf32>
    %45 = arith.mulf %40, %44 : vector<8x8xf32>
    %cst_17 = arith.constant dense<0.000000e+00> : vector<8x8xf32>
    %46 = tpu.matmul %45, %32, %cst_17 {dimension_numbers = #tpu.dot_dimension_numbers<[1], [0], [0], [1], [0, 0, 1, 1], [], []>} : vector<8x8xf32>, vector<8x8xf32>, vector<8x8xf32> -> vector<8x8xf32>
    %c0_18 = arith.constant 0 : index
    %c0_19 = arith.constant 0 : index
    %47 = vector.load %arg4[%c0_18, %c0_19] : memref<32x32xf32, #tpu.memory_space<vmem>>, vector<8x32xf32>
    %cst_20 = arith.constant dense<0.000000e+00> : vector<8x32xf32>
    %48 = tpu.matmul %46, %47, %cst_20 {dimension_numbers = #tpu.dot_dimension_numbers<[1], [0], [0], [1], [0, 0, 1, 1], [], []>} : vector<8x8xf32>, vector<8x32xf32>, vector<8x32xf32> -> vector<8x32xf32>
    %49 = arith.addf %20, %48 : vector<8x32xf32>
    %c0_21 = arith.constant 0 : index
    %c0_22 = arith.constant 0 : index
    %c8 = arith.constant 8 : index
    %50 = vector.load %arg2[%c0_21, %c0_22, %c8] : memref<1x8x96xf32, #tpu.memory_space<vmem>>, vector<1x8x8xf32>
    %51 = vector.shape_cast %50 : vector<1x8x8xf32> to vector<8x8xf32>
    %cst_23 = arith.constant 0.353553385 : f32
    %52 = vector.broadcast %cst_23 : f32 to vector<8x8xf32>
    %53 = arith.mulf %51, %52 : vector<8x8xf32>
    %c0_24 = arith.constant 0 : index
    %c0_25 = arith.constant 0 : index
    %c40 = arith.constant 40 : index
    %54 = vector.load %arg2[%c0_24, %c0_25, %c40] : memref<1x8x96xf32, #tpu.memory_space<vmem>>, vector<1x8x8xf32>
    %55 = vector.shape_cast %54 : vector<1x8x8xf32> to vector<8x8xf32>
    %c0_26 = arith.constant 0 : index
    %c0_27 = arith.constant 0 : index
    %c72 = arith.constant 72 : index
    %56 = vector.load %arg2[%c0_26, %c0_27, %c72] : memref<1x8x96xf32, #tpu.memory_space<vmem>>, vector<1x8x8xf32>
    %57 = vector.shape_cast %56 : vector<1x8x8xf32> to vector<8x8xf32>
    %cst_28 = arith.constant 0.000000e+00 : f32
    %58 = vector.shape_cast %15 : vector<8x1xi1> to vector<8x1xi1>
    %59 = vector.broadcast %58 : vector<8x1xi1> to vector<8x8xi1>
    %60 = vector.broadcast %cst_28 : f32 to vector<8x8xf32>
    %61 = arith.select %59, %57, %60 : vector<8x8xi1>, vector<8x8xf32>
    %cst_29 = arith.constant dense<0.000000e+00> : vector<8x8xf32>
    %62 = tpu.matmul %53, %55, %cst_29 {dimension_numbers = #tpu.dot_dimension_numbers<[1], [1], [0], [0], [0, 0, 1, 0], [], []>} : vector<8x8xf32>, vector<8x8xf32>, vector<8x8xf32> -> vector<8x8xf32>
    %cst_30 = arith.constant -1.000000e+30 : f32
    %63 = vector.broadcast %cst_30 : f32 to vector<8x8xf32>
    %64 = arith.select %10, %62, %63 : vector<8x8xi1>, vector<8x8xf32>
    %cst_31 = arith.constant dense<0xFF800000> : vector<8xf32>
    %65 = vector.multi_reduction <maximumf>, %64, %cst_31 [1] : vector<8x8xf32> to vector<8xf32>
    %66 = vector.shape_cast %65 : vector<8xf32> to vector<8x1xf32>
    %67 = vector.broadcast %66 : vector<8x1xf32> to vector<8x8xf32>
    %68 = arith.subf %64, %67 : vector<8x8xf32>
    %69 = math.exp %68 : vector<8x8xf32>
    %cst_32 = arith.constant dense<0.000000e+00> : vector<8xf32>
    %70 = vector.multi_reduction <add>, %69, %cst_32 [1] : vector<8x8xf32> to vector<8xf32>
    %71 = vector.shape_cast %70 : vector<8xf32> to vector<8x1xf32>
    %72 = tpu.reciprocal %71 {approx = true} : vector<8x1xf32> -> vector<8x1xf32>
    %73 = vector.broadcast %72 : vector<8x1xf32> to vector<8x8xf32>
    %74 = arith.mulf %69, %73 : vector<8x8xf32>
    %cst_33 = arith.constant dense<0.000000e+00> : vector<8x8xf32>
    %75 = tpu.matmul %74, %61, %cst_33 {dimension_numbers = #tpu.dot_dimension_numbers<[1], [0], [0], [1], [0, 0, 1, 1], [], []>} : vector<8x8xf32>, vector<8x8xf32>, vector<8x8xf32> -> vector<8x8xf32>
    %c8_34 = arith.constant 8 : index
    %c0_35 = arith.constant 0 : index
    %76 = vector.load %arg4[%c8_34, %c0_35] : memref<32x32xf32, #tpu.memory_space<vmem>>, vector<8x32xf32>
    %cst_36 = arith.constant dense<0.000000e+00> : vector<8x32xf32>
    %77 = tpu.matmul %75, %76, %cst_36 {dimension_numbers = #tpu.dot_dimension_numbers<[1], [0], [0], [1], [0, 0, 1, 1], [], []>} : vector<8x8xf32>, vector<8x32xf32>, vector<8x32xf32> -> vector<8x32xf32>
    %78 = arith.addf %49, %77 : vector<8x32xf32>
    %c0_37 = arith.constant 0 : index
    %c0_38 = arith.constant 0 : index
    %c16 = arith.constant 16 : index
    %79 = vector.load %arg2[%c0_37, %c0_38, %c16] : memref<1x8x96xf32, #tpu.memory_space<vmem>>, vector<1x8x8xf32>
    %80 = vector.shape_cast %79 : vector<1x8x8xf32> to vector<8x8xf32>
    %cst_39 = arith.constant 0.353553385 : f32
    %81 = vector.broadcast %cst_39 : f32 to vector<8x8xf32>
    %82 = arith.mulf %80, %81 : vector<8x8xf32>
    %c0_40 = arith.constant 0 : index
    %c0_41 = arith.constant 0 : index
    %c48 = arith.constant 48 : index
    %83 = vector.load %arg2[%c0_40, %c0_41, %c48] : memref<1x8x96xf32, #tpu.memory_space<vmem>>, vector<1x8x8xf32>
    %84 = vector.shape_cast %83 : vector<1x8x8xf32> to vector<8x8xf32>
    %c0_42 = arith.constant 0 : index
    %c0_43 = arith.constant 0 : index
    %c80 = arith.constant 80 : index
    %85 = vector.load %arg2[%c0_42, %c0_43, %c80] : memref<1x8x96xf32, #tpu.memory_space<vmem>>, vector<1x8x8xf32>
    %86 = vector.shape_cast %85 : vector<1x8x8xf32> to vector<8x8xf32>
    %cst_44 = arith.constant 0.000000e+00 : f32
    %87 = vector.shape_cast %15 : vector<8x1xi1> to vector<8x1xi1>
    %88 = vector.broadcast %87 : vector<8x1xi1> to vector<8x8xi1>
    %89 = vector.broadcast %cst_44 : f32 to vector<8x8xf32>
    %90 = arith.select %88, %86, %89 : vector<8x8xi1>, vector<8x8xf32>
    %cst_45 = arith.constant dense<0.000000e+00> : vector<8x8xf32>
    %91 = tpu.matmul %82, %84, %cst_45 {dimension_numbers = #tpu.dot_dimension_numbers<[1], [1], [0], [0], [0, 0, 1, 0], [], []>} : vector<8x8xf32>, vector<8x8xf32>, vector<8x8xf32> -> vector<8x8xf32>
    %cst_46 = arith.constant -1.000000e+30 : f32
    %92 = vector.broadcast %cst_46 : f32 to vector<8x8xf32>
    %93 = arith.select %10, %91, %92 : vector<8x8xi1>, vector<8x8xf32>
    %cst_47 = arith.constant dense<0xFF800000> : vector<8xf32>
    %94 = vector.multi_reduction <maximumf>, %93, %cst_47 [1] : vector<8x8xf32> to vector<8xf32>
    %95 = vector.shape_cast %94 : vector<8xf32> to vector<8x1xf32>
    %96 = vector.broadcast %95 : vector<8x1xf32> to vector<8x8xf32>
    %97 = arith.subf %93, %96 : vector<8x8xf32>
    %98 = math.exp %97 : vector<8x8xf32>
    %cst_48 = arith.constant dense<0.000000e+00> : vector<8xf32>
    %99 = vector.multi_reduction <add>, %98, %cst_48 [1] : vector<8x8xf32> to vector<8xf32>
    %100 = vector.shape_cast %99 : vector<8xf32> to vector<8x1xf32>
    %101 = tpu.reciprocal %100 {approx = true} : vector<8x1xf32> -> vector<8x1xf32>
    %102 = vector.broadcast %101 : vector<8x1xf32> to vector<8x8xf32>
    %103 = arith.mulf %98, %102 : vector<8x8xf32>
    %cst_49 = arith.constant dense<0.000000e+00> : vector<8x8xf32>
    %104 = tpu.matmul %103, %90, %cst_49 {dimension_numbers = #tpu.dot_dimension_numbers<[1], [0], [0], [1], [0, 0, 1, 1], [], []>} : vector<8x8xf32>, vector<8x8xf32>, vector<8x8xf32> -> vector<8x8xf32>
    %c16_50 = arith.constant 16 : index
    %c0_51 = arith.constant 0 : index
    %105 = vector.load %arg4[%c16_50, %c0_51] : memref<32x32xf32, #tpu.memory_space<vmem>>, vector<8x32xf32>
    %cst_52 = arith.constant dense<0.000000e+00> : vector<8x32xf32>
    %106 = tpu.matmul %104, %105, %cst_52 {dimension_numbers = #tpu.dot_dimension_numbers<[1], [0], [0], [1], [0, 0, 1, 1], [], []>} : vector<8x8xf32>, vector<8x32xf32>, vector<8x32xf32> -> vector<8x32xf32>
    %107 = arith.addf %78, %106 : vector<8x32xf32>
    %c0_53 = arith.constant 0 : index
    %c0_54 = arith.constant 0 : index
    %c24 = arith.constant 24 : index
    %108 = vector.load %arg2[%c0_53, %c0_54, %c24] : memref<1x8x96xf32, #tpu.memory_space<vmem>>, vector<1x8x8xf32>
    %109 = vector.shape_cast %108 : vector<1x8x8xf32> to vector<8x8xf32>
    %cst_55 = arith.constant 0.353553385 : f32
    %110 = vector.broadcast %cst_55 : f32 to vector<8x8xf32>
    %111 = arith.mulf %109, %110 : vector<8x8xf32>
    %c0_56 = arith.constant 0 : index
    %c0_57 = arith.constant 0 : index
    %c56 = arith.constant 56 : index
    %112 = vector.load %arg2[%c0_56, %c0_57, %c56] : memref<1x8x96xf32, #tpu.memory_space<vmem>>, vector<1x8x8xf32>
    %113 = vector.shape_cast %112 : vector<1x8x8xf32> to vector<8x8xf32>
    %c0_58 = arith.constant 0 : index
    %c0_59 = arith.constant 0 : index
    %c88 = arith.constant 88 : index
    %114 = vector.load %arg2[%c0_58, %c0_59, %c88] : memref<1x8x96xf32, #tpu.memory_space<vmem>>, vector<1x8x8xf32>
    %115 = vector.shape_cast %114 : vector<1x8x8xf32> to vector<8x8xf32>
    %cst_60 = arith.constant 0.000000e+00 : f32
    %116 = vector.shape_cast %15 : vector<8x1xi1> to vector<8x1xi1>
    %117 = vector.broadcast %116 : vector<8x1xi1> to vector<8x8xi1>
    %118 = vector.broadcast %cst_60 : f32 to vector<8x8xf32>
    %119 = arith.select %117, %115, %118 : vector<8x8xi1>, vector<8x8xf32>
    %cst_61 = arith.constant dense<0.000000e+00> : vector<8x8xf32>
    %120 = tpu.matmul %111, %113, %cst_61 {dimension_numbers = #tpu.dot_dimension_numbers<[1], [1], [0], [0], [0, 0, 1, 0], [], []>} : vector<8x8xf32>, vector<8x8xf32>, vector<8x8xf32> -> vector<8x8xf32>
    %cst_62 = arith.constant -1.000000e+30 : f32
    %121 = vector.broadcast %cst_62 : f32 to vector<8x8xf32>
    %122 = arith.select %10, %120, %121 : vector<8x8xi1>, vector<8x8xf32>
    %cst_63 = arith.constant dense<0xFF800000> : vector<8xf32>
    %123 = vector.multi_reduction <maximumf>, %122, %cst_63 [1] : vector<8x8xf32> to vector<8xf32>
    %124 = vector.shape_cast %123 : vector<8xf32> to vector<8x1xf32>
    %125 = vector.broadcast %124 : vector<8x1xf32> to vector<8x8xf32>
    %126 = arith.subf %122, %125 : vector<8x8xf32>
    %127 = math.exp %126 : vector<8x8xf32>
    %cst_64 = arith.constant dense<0.000000e+00> : vector<8xf32>
    %128 = vector.multi_reduction <add>, %127, %cst_64 [1] : vector<8x8xf32> to vector<8xf32>
    %129 = vector.shape_cast %128 : vector<8xf32> to vector<8x1xf32>
    %130 = tpu.reciprocal %129 {approx = true} : vector<8x1xf32> -> vector<8x1xf32>
    %131 = vector.broadcast %130 : vector<8x1xf32> to vector<8x8xf32>
    %132 = arith.mulf %127, %131 : vector<8x8xf32>
    %cst_65 = arith.constant dense<0.000000e+00> : vector<8x8xf32>
    %133 = tpu.matmul %132, %119, %cst_65 {dimension_numbers = #tpu.dot_dimension_numbers<[1], [0], [0], [1], [0, 0, 1, 1], [], []>} : vector<8x8xf32>, vector<8x8xf32>, vector<8x8xf32> -> vector<8x8xf32>
    %c24_66 = arith.constant 24 : index
    %c0_67 = arith.constant 0 : index
    %134 = vector.load %arg4[%c24_66, %c0_67] : memref<32x32xf32, #tpu.memory_space<vmem>>, vector<8x32xf32>
    %cst_68 = arith.constant dense<0.000000e+00> : vector<8x32xf32>
    %135 = tpu.matmul %133, %134, %cst_68 {dimension_numbers = #tpu.dot_dimension_numbers<[1], [0], [0], [1], [0, 0, 1, 1], [], []>} : vector<8x8xf32>, vector<8x32xf32>, vector<8x32xf32> -> vector<8x32xf32>
    %136 = arith.addf %107, %135 : vector<8x32xf32>
    %c0_69 = arith.constant 0 : index
    %c0_70 = arith.constant 0 : index
    %c0_71 = arith.constant 0 : index
    %137 = vector.load %arg6[%c0_69, %c0_70, %c0_71] : memref<1x8x32xf32, #tpu.memory_space<vmem>>, vector<1x8x32xf32>
    %138 = vector.shape_cast %137 : vector<1x8x32xf32> to vector<8x32xf32>
    %139 = vector.shape_cast %136 : vector<8x32xf32> to vector<1x8x32xf32>
    tpu.vector_store %arg6[%c0_69, %c0_70, %c0_71], %139 {strides = array<i32>} : memref<1x8x32xf32, #tpu.memory_space<vmem>>, vector<1x8x32xf32>,
    return
  }
  func.func @transform_0(%arg0: i32, %arg1: i32) -> (i32, i32, i32) {
    %c0_i32 = arith.constant 0 : i32
    %c0_i32_0 = arith.constant 0 : i32
    return %arg0, %arg1, %c0_i32 : i32, i32, i32
  }
  func.func @transform_1(%arg0: i32, %arg1: i32) -> (i32, i32, i32) {
    %c0_i32 = arith.constant 0 : i32
    %c0_i32_0 = arith.constant 0 : i32
    return %arg0, %arg1, %c0_i32 : i32, i32, i32
  }
  func.func @transform_2(%arg0: i32, %arg1: i32) -> (i32, i32) {
    %c0_i32 = arith.constant 0 : i32
    %c0_i32_0 = arith.constant 0 : i32
    %c0_i32_1 = arith.constant 0 : i32
    return %c0_i32, %c0_i32_0 : i32, i32
  }
  func.func @transform_3(%arg0: i32, %arg1: i32) -> (i32, i32) {
    %c0_i32 = arith.constant 0 : i32
    %c0_i32_0 = arith.constant 0 : i32
    %c0_i32_1 = arith.constant 0 : i32
    return %c0_i32, %c0_i32_0 : i32, i32
  }
  func.func @transform_4(%arg0: i32, %arg1: i32) -> (i32, i32, i32) {
    %c0_i32 = arith.constant 0 : i32
    %c0_i32_0 = arith.constant 0 : i32
    return %arg0, %arg1, %c0_i32 : i32, i32, i32
  }
}

module attributes {stable_mosaic.version = 11 : i64} {
  func.func @kernel(%arg0: i32, %arg1: i32, %arg2: i32, %arg3: memref<24x128xf32, #tpu.memory_space<vmem>>, %arg4: memref<128x32xf32, #tpu.memory_space<vmem>>, %arg5: memref<1x32xf32, #tpu.memory_space<vmem>>, %arg6: memref<24x32xf32, #tpu.memory_space<vmem>>, %arg7: memref<24x32xf32, #tpu.memory_space<vmem>>, %arg8: memref<24x32xf32, #tpu.memory_space<vmem>>) attributes {dimension_semantics = [#tpu.dimension_semantics<parallel>, #tpu.dimension_semantics<parallel>, #tpu.dimension_semantics<arbitrary>], iteration_bounds = array<i64: 1, 1, 1>, scalar_prefetch = 0 : i64, scratch_operands = 1 : i64, tpu.core_type = #tpu.core_type<tc>, window_params = [{transform_indices = @transform_0, window_bounds = array<i64: 24, 128>}, {transform_indices = @transform_1, window_bounds = array<i64: 128, 32>}, {transform_indices = @transform_2, window_bounds = array<i64: 1, 32>}, {transform_indices = @transform_3, window_bounds = array<i64: 24, 32>}, {transform_indices = @transform_4, window_bounds = array<i64: 24, 32>}]} {
    %c0_i32 = arith.constant 0 : i32
    %0 = arith.cmpi eq, %arg2, %c0_i32 : i32
    %1 = arith.extui %0 : i1 to i32
    %c0_i32_0 = arith.constant 0 : i32
    %2 = arith.cmpi ne, %1, %c0_i32_0 : i32
    scf.if %2 {
      %cst_10 = arith.constant 0.000000e+00 : f32
      %12 = vector.broadcast %cst_10 : f32 to vector<24x32xf32>
      %c0_11 = arith.constant 0 : index
      %c0_12 = arith.constant 0 : index
      %13 = vector.load %arg8[%c0_11, %c0_12] : memref<24x32xf32, #tpu.memory_space<vmem>>, vector<24x32xf32>
      tpu.vector_store %arg8[%c0_11, %c0_12], %12 {strides = array<i32>} : memref<24x32xf32, #tpu.memory_space<vmem>>, vector<24x32xf32>,
    } else {
    }
    %c0 = arith.constant 0 : index
    %c0_1 = arith.constant 0 : index
    %3 = vector.load %arg8[%c0, %c0_1] : memref<24x32xf32, #tpu.memory_space<vmem>>, vector<24x32xf32>
    %c0_2 = arith.constant 0 : index
    %c0_3 = arith.constant 0 : index
    %4 = vector.load %arg3[%c0_2, %c0_3] : memref<24x128xf32, #tpu.memory_space<vmem>>, vector<24x128xf32>
    %c0_4 = arith.constant 0 : index
    %c0_5 = arith.constant 0 : index
    %5 = vector.load %arg4[%c0_4, %c0_5] : memref<128x32xf32, #tpu.memory_space<vmem>>, vector<128x32xf32>
    %cst = arith.constant dense<0.000000e+00> : vector<24x32xf32>
    %6 = tpu.matmul %4, %5, %cst {dimension_numbers = #tpu.dot_dimension_numbers<[1], [0], [0], [1], [0, 0, 1, 1], [], []>} : vector<24x128xf32>, vector<128x32xf32>, vector<24x32xf32> -> vector<24x32xf32>
    %7 = arith.addf %3, %6 : vector<24x32xf32>
    %c0_6 = arith.constant 0 : index
    %c0_7 = arith.constant 0 : index
    %8 = vector.load %arg8[%c0_6, %c0_7] : memref<24x32xf32, #tpu.memory_space<vmem>>, vector<24x32xf32>
    tpu.vector_store %arg8[%c0_6, %c0_7], %7 {strides = array<i32>} : memref<24x32xf32, #tpu.memory_space<vmem>>, vector<24x32xf32>,
    %c0_i32_8 = arith.constant 0 : i32
    %9 = arith.cmpi eq, %arg2, %c0_i32_8 : i32
    %10 = arith.extui %9 : i1 to i32
    %c0_i32_9 = arith.constant 0 : i32
    %11 = arith.cmpi ne, %10, %c0_i32_9 : i32
    scf.if %11 {
      %c0_10 = arith.constant 0 : index
      %c0_11 = arith.constant 0 : index
      %12 = vector.load %arg8[%c0_10, %c0_11] : memref<24x32xf32, #tpu.memory_space<vmem>>, vector<24x32xf32>
      %c0_12 = arith.constant 0 : index
      %c0_13 = arith.constant 0 : index
      %13 = vector.load %arg5[%c0_12, %c0_13] : memref<1x32xf32, #tpu.memory_space<vmem>>, vector<1x32xf32>
      %14 = vector.broadcast %13 : vector<1x32xf32> to vector<24x32xf32>
      %15 = arith.addf %12, %14 : vector<24x32xf32>
      %c0_14 = arith.constant 0 : index
      %c0_15 = arith.constant 0 : index
      %16 = vector.load %arg6[%c0_14, %c0_15] : memref<24x32xf32, #tpu.memory_space<vmem>>, vector<24x32xf32>
      %17 = arith.addf %15, %16 : vector<24x32xf32>
      %c0_16 = arith.constant 0 : index
      %c0_17 = arith.constant 0 : index
      %18 = vector.load %arg7[%c0_16, %c0_17] : memref<24x32xf32, #tpu.memory_space<vmem>>, vector<24x32xf32>
      tpu.vector_store %arg7[%c0_16, %c0_17], %17 {strides = array<i32>} : memref<24x32xf32, #tpu.memory_space<vmem>>, vector<24x32xf32>,
    } else {
    }
    return
  }
  func.func @transform_0(%arg0: i32, %arg1: i32, %arg2: i32) -> (i32, i32) {
    %c0_i32 = arith.constant 0 : i32
    return %arg0, %arg2 : i32, i32
  }
  func.func @transform_1(%arg0: i32, %arg1: i32, %arg2: i32) -> (i32, i32) {
    %c0_i32 = arith.constant 0 : i32
    return %arg2, %arg1 : i32, i32
  }
  func.func @transform_2(%arg0: i32, %arg1: i32, %arg2: i32) -> (i32, i32) {
    %c0_i32 = arith.constant 0 : i32
    %c0_i32_0 = arith.constant 0 : i32
    return %c0_i32, %arg1 : i32, i32
  }
  func.func @transform_3(%arg0: i32, %arg1: i32, %arg2: i32) -> (i32, i32) {
    %c0_i32 = arith.constant 0 : i32
    return %arg0, %arg1 : i32, i32
  }
  func.func @transform_4(%arg0: i32, %arg1: i32, %arg2: i32) -> (i32, i32) {
    %c0_i32 = arith.constant 0 : i32
    return %arg0, %arg1 : i32, i32
  }
}

</mosaic_0001>

<llo_original>
// kernel: block_forward.4
$region0: #{block_forward.4}
  #allocation0 [shape = 'u32[]', space=smem, size = 0x4, offset = 0x4, fixed_abs, tag = 'smem constant byte address 0x4 - core index']
  #allocation1 [shape = 'u32[144,128]{1,0:T(1,128)}', space=vmem, size = 0x12000, scoped, tag = 'internal scratch']
  %s0 = inlined_call_operand.vmem [shape: f32[24,32], index: 0, kind: input, shape index: {}]
  %s1 = inlined_call_operand.vmem [shape: f32[1,32], index: 1, kind: input, shape index: {}]
  %s2 = inlined_call_operand.vmem [shape: f32[1,32], index: 2, kind: input, shape index: {}]
  %s3 = inlined_call_operand.vmem [shape: f32[32,96], index: 3, kind: input, shape index: {}]
  %s4 = inlined_call_operand.vmem [shape: f32[1,96], index: 4, kind: input, shape index: {}]
  %s5 = inlined_call_operand.vmem [shape: f32[24,96], index: 5, kind: output, shape index: {}]
  %s6 = sld [smem:[#allocation0]]
  $region30: #{block_forward.4} parent=0
    _
  %s8 = ssub.s32 1, %s6
  %s9 = scalar_select 0, %s8, %s6
  // Predicated region
  $region2: #{block_forward.4} parent=0 // pred_check
    _
  $region3: #{block_forward.4} parent=0 // pred_check_branch
    %11 = sbr.rel (0) target = $region5
  $region4: #{block_forward.4} parent=0 // pred_region
    _
  $region5: #{block_forward.4} parent=0 // pred_fallthru
    _
  // Predicated region
  $region6: #{block_forward.4} parent=0 // pred_check
    _
  $region7: #{block_forward.4} parent=0 // pred_check_branch
    %13 = sbr.rel (0) target = $region9
  $region8: #{block_forward.4} parent=0 // pred_region
    _
  $region9: #{block_forward.4} parent=0 // pred_fallthru
    _
  // Predicated region
  $region10: #{block_forward.4} parent=0 // pred_check
    _
  $region11: #{block_forward.4} parent=0 // pred_check_branch
    %15 = sbr.rel (0) target = $region13
  $region12: #{block_forward.4} parent=0 // pred_region
    _
  $region13: #{block_forward.4} parent=0 // pred_fallthru
    _
  // Predicated region
  $region14: #{block_forward.4} parent=0 // pred_check
    _
  $region15: #{block_forward.4} parent=0 // pred_check_branch
    %17 = sbr.rel (0) target = $region17
  $region16: #{block_forward.4} parent=0 // pred_region
    _
  $region17: #{block_forward.4} parent=0 // pred_fallthru
    _
  // Predicated region
  $region18: #{block_forward.4} parent=0 // pred_check
    _
  $region19: #{block_forward.4} parent=0 // pred_check_branch
    %19 = sbr.rel (0) target = $region21
  $region20: #{block_forward.4} parent=0 // pred_region
    _
  $region21: #{block_forward.4} parent=0 // pred_fallthru
    _
  %v20 = vld [vmem:[%s0] sm:$0xff]
  %v21 = vld [vmem:[%s0 + $0x8] sm:$0xff]
  %v22 = vld [vmem:[%s0 + $0x10] sm:$0xff]
  %vm23 = vcmask 261120
  %v24 = vsel %vm23, %v20, 0.0
  %25 = vadd.xlane.f32.xlu0 %v24
  %v26 = vpop.xlane.xlu0 %25
  %v27 = vsel %vm23, %v21, 0.0
  %28 = vadd.xlane.f32.xlu0 %v27
  %v29 = vpop.xlane.xlu0 %28
  %v30 = vsel %vm23, %v22, 0.0
  %31 = vadd.xlane.f32.xlu0 %v30
  %v32 = vpop.xlane.xlu0 %31
  %v33 = vrcp.pop 32.0
  %v34 = vmul.f32 %v26, %v33
  %v35 = vmul.f32 %v29, %v33
  %v36 = vmul.f32 %v32, %v33
  %v37 = vsub.f32 %v20, %v34
  %v38 = vsub.f32 %v21, %v35
  %v39 = vsub.f32 %v22, %v36
  %v40 = vmul.f32 %v37, %v37
  %v41 = vmul.f32 %v38, %v38
  %v42 = vmul.f32 %v39, %v39
  %v43 = vsel %vm23, %v40, 0.0
  %44 = vadd.xlane.f32.xlu0 %v43
  %v45 = vpop.xlane.xlu0 %44
  %v46 = vsel %vm23, %v41, 0.0
  %47 = vadd.xlane.f32.xlu0 %v46
  %v48 = vpop.xlane.xlu0 %47
  %v49 = vsel %vm23, %v42, 0.0
  %50 = vadd.xlane.f32.xlu0 %v49
  %v51 = vpop.xlane.xlu0 %50
  %v52 = vmul.f32 %v45, %v33
  %v53 = vmul.f32 %v48, %v33
  %v54 = vmul.f32 %v51, %v33
  %v55 = vadd.f32 %v52, 1e-05
  %v56 = vadd.f32 %v53, 1e-05
  %v57 = vadd.f32 %v54, 1e-05
  %v58 = vrsqrt.pop %v55
  %v59 = vrsqrt.pop %v56
  %v60 = vrsqrt.pop %v57
  %v61 = vmul.f32 %v37, %v58
  %v62 = vmul.f32 %v38, %v59
  %v63 = vmul.f32 %v39, %v60
  %v64 = vld [vmem:[%s1] sm:$0x1]
  %v66 = vlaneseq
  %v67 = vshrl.u32 %v66, 7
  %v68 = vsub.s32 0, %v67
  %v69 = vrot.slane %v64, %v68
  %v71 = vmul.f32 %v61, %v69
  %v72 = vmul.f32 %v62, %v69
  %v73 = vmul.f32 %v63, %v69
  %v74 = vld [vmem:[%s2] sm:$0x1]
  %v76 = vlaneseq
  %v77 = vshrl.u32 %v76, 7
  %v78 = vsub.s32 0, %v77
  %v79 = vrot.slane %v74, %v78
  %v81 = vadd.f32 %v71, %v79
  %v82 = vadd.f32 %v72, %v79
  %v83 = vadd.f32 %v73, %v79
  %v84 = vld [vmem:[%s3] sm:$0xff]
  %v85 = vld [vmem:[%s3 + $0x8] sm:$0xff]
  %v86 = vld [vmem:[%s3 + $0x10] sm:$0xff]
  %v87 = vld [vmem:[%s3 + $0x18] sm:$0xff]
  %v88 = vld [vmem:[%s4] sm:$0x1]
  %v90 = vlaneseq
  %v91 = vshrl.u32 %v90, 7
  %v92 = vsub.s32 0, %v91
  %v93 = vrot.slane %v88, %v92
  %v96 = vsel %vm23, %v81, 0
  %v99 = vsel %vm23, %v82, 0
  %v102 = vsel %vm23, %v83, 0
  %104 = vmatprep.subr.mxu0 0.0
  %105 = vmatpush1.msra.mxu0 %v84
  %106 = vmatprep.subr.mxu0 0.0
  %107 = vmatpush1.msra.mxu0 %v85
  %108 = vmatprep.subr.mxu0 0.0
  %109 = vmatpush1.msra.mxu0 %v86
  %110 = vmatprep.subr.mxu0 0.0
  %111 = vmatpush1.msra.mxu0 %v87
  %112 = vmatprep.subr.mxu0 0.0
  %113 = vmatpush1.msra.mxu0 0.0
  %114 = vmatprep.subr.mxu0 0.0
  %115 = vmatpush1.msra.mxu0 0.0
  %116 = vmatprep.subr.mxu0 0.0
  %117 = vmatpush1.msra.mxu0 0.0
  %118 = vmatprep.subr.mxu0 0.0
  %119 = vmatpush1.msra.mxu0 0.0
  %120 = vmatprep.subr.mxu0 0.0
  %121 = vmatpush1.msra.mxu0 0.0
  %122 = vmatprep.subr.mxu0 0.0
  %123 = vmatpush1.msra.mxu0 0.0
  %124 = vmatprep.subr.mxu0 0.0
  %125 = vmatpush1.msra.mxu0 0.0
  %126 = vmatprep.subr.mxu0 0.0
  %127 = vmatpush1.msra.mxu0 0.0
  %128 = vmatprep.subr.mxu0 0.0
  %129 = vmatpush1.msra.mxu0 0.0
  %130 = vmatprep.subr.mxu0 0.0
  %131 = vmatpush1.msra.mxu0 0.0
  %132 = vmatprep.subr.mxu0 0.0
  %133 = vmatpush1.msra.mxu0 0.0
  %134 = vmatprep.subr.mxu0 0.0
  %135 = vmatpush1.msra.mxu0 0.0
  %136 = vmatprep.subr.mxu0 0.0
  %137 = vmatpush1.msra.mxu0 0.0
  %138 = vmatprep.subr.mxu0 0.0
  %139 = vmatpush1.msra.mxu0 0.0
  %140 = vmatprep.subr.mxu0 0.0
  %141 = vmatpush1.msra.mxu0 0.0
  %142 = vmatprep.subr.mxu0 0.0
  %143 = vmatpush1.msra.mxu0 0.0
  %144 = vmatprep.subr.mxu0 0.0
  %145 = vmatpush1.msra.mxu0 0.0
  %146 = vmatprep.subr.mxu0 0.0
  %147 = vmatpush1.msra.mxu0 0.0
  %148 = vmatprep.subr.mxu0 0.0
  %149 = vmatpush1.msra.mxu0 0.0
  %150 = vmatprep.subr.mxu0 0.0
  %151 = vmatpush1.msra.mxu0 0.0
  %152 = vmatprep.subr.mxu0 0.0
  %153 = vmatpush1.msra.mxu0 0.0
  %154 = vmatprep.subr.mxu0 0.0
  %155 = vmatpush1.msra.mxu0 0.0
  %156 = vmatprep.subr.mxu0 0.0
  %157 = vmatpush1.msra.mxu0 0.0
  %158 = vmatprep.subr.mxu0 0.0
  %159 = vmatpush1.msra.mxu0 0.0
  %160 = vmatprep.subr.mxu0 0.0
  %161 = vmatpush1.msra.mxu0 0.0
  %162 = vmatprep.subr.mxu0 0.0
  %163 = vmatpush1.msra.mxu0 0.0
  %164 = vmatprep.subr.mxu0 0.0
  %165 = vmatpush1.msra.mxu0 0.0
  %166 = vmatprep.subr.mxu0 0.0
  %167 = vmatpush1.msra.mxu0 0.0
  %168 = vmatprep.mubr.f32.mxu0 0.0
  %169 = vmatmul.mubr.f32.gmra.mrb[0].mxu0 %v96
  %v170 = vpop.f32.mrb[0].mxu0
  %v171 = vadd.f32 %v93, %v170
  %v172 = vpop.f32.mrb[0].mxu0
  %173 = vmatprep.mubr.f32.mxu0 0.0
  %174 = vmatmul.mubr.f32.gmra.mrb[0].mxu0 %v99
  %v175 = vpop.f32.mrb[0].mxu0
  %v176 = vadd.f32 %v93, %v175
  %v177 = vpop.f32.mrb[0].mxu0
  %178 = vmatprep.mubr.f32.mxu0 0.0
  %179 = vmatmul.mubr.f32.gmra.mrb[0].mxu0 %v102
  %v180 = vpop.f32.mrb[0].mxu0
  %v181 = vadd.f32 %v93, %v180
  %v182 = vpop.f32.mrb[0].mxu0
  %183 = vdwg.mxu0
  %vm184 = vcmask 785408
  %185 = vst.msk [vmem:[%s5] sm:$0xff] %vm184, %v171
  %186 = vst.msk [vmem:[%s5 + $0x8] sm:$0xff] %vm184, %v176
  %187 = vst.msk [vmem:[%s5 + $0x10] sm:$0xff] %vm184, %v181
  // Predicated region
  $region22: #{block_forward.4} parent=0 // pred_check
    _
  $region23: #{block_forward.4} parent=0 // pred_check_branch
    %189 = sbr.rel (0) target = $region25
  $region24: #{block_forward.4} parent=0 // pred_region
    _
  $region25: #{block_forward.4} parent=0 // pred_fallthru
    _
  // Predicated region
  $region26: #{block_forward.4} parent=0 // pred_check
    _
  $region27: #{block_forward.4} parent=0 // pred_check_branch
    %191 = sbr.rel (0) target = $region29
  $region28: #{block_forward.4} parent=0 // pred_region
    _
  $region29: #{block_forward.4} parent=0 // pred_fallthru
    _

// kernel: block_forward.6
$region0: #{block_forward.6}
  #allocation0 [shape = 'u32[]', space=smem, size = 0x4, offset = 0x4, fixed_abs, tag = 'smem constant byte address 0x4 - core index']
  #allocation1 [shape = 'u32[144,128]{1,0:T(1,128)}', space=vmem, size = 0x12000, scoped, tag = 'internal scratch']
  %s0 = inlined_call_operand.vmem [shape: f32[24,32], index: 0, kind: input, shape index: {}]
  %s1 = inlined_call_operand.vmem [shape: f32[1,32], index: 1, kind: input, shape index: {}]
  %s2 = inlined_call_operand.vmem [shape: f32[1,32], index: 2, kind: input, shape index: {}]
  %s3 = inlined_call_operand.vmem [shape: f32[32,128], index: 3, kind: input, shape index: {}]
  %s4 = inlined_call_operand.vmem [shape: f32[1,128], index: 4, kind: input, shape index: {}]
  %s5 = inlined_call_operand.vmem [shape: f32[24,128], index: 5, kind: output, shape index: {}]
  %s6 = sld [smem:[#allocation0]]
  $region30: #{block_forward.6} parent=0
    _
  %s8 = ssub.s32 1, %s6
  %s9 = scalar_select 0, %s8, %s6
  // Predicated region
  $region2: #{block_forward.6} parent=0 // pred_check
    _
  $region3: #{block_forward.6} parent=0 // pred_check_branch
    %11 = sbr.rel (0) target = $region5
  $region4: #{block_forward.6} parent=0 // pred_region
    _
  $region5: #{block_forward.6} parent=0 // pred_fallthru
    _
  // Predicated region
  $region6: #{block_forward.6} parent=0 // pred_check
    _
  $region7: #{block_forward.6} parent=0 // pred_check_branch
    %13 = sbr.rel (0) target = $region9
  $region8: #{block_forward.6} parent=0 // pred_region
    _
  $region9: #{block_forward.6} parent=0 // pred_fallthru
    _
  // Predicated region
  $region10: #{block_forward.6} parent=0 // pred_check
    _
  $region11: #{block_forward.6} parent=0 // pred_check_branch
    %15 = sbr.rel (0) target = $region13
  $region12: #{block_forward.6} parent=0 // pred_region
    _
  $region13: #{block_forward.6} parent=0 // pred_fallthru
    _
  // Predicated region
  $region14: #{block_forward.6} parent=0 // pred_check
    _
  $region15: #{block_forward.6} parent=0 // pred_check_branch
    %17 = sbr.rel (0) target = $region17
  $region16: #{block_forward.6} parent=0 // pred_region
    _
  $region17: #{block_forward.6} parent=0 // pred_fallthru
    _
  // Predicated region
  $region18: #{block_forward.6} parent=0 // pred_check
    _
  $region19: #{block_forward.6} parent=0 // pred_check_branch
    %19 = sbr.rel (0) target = $region21
  $region20: #{block_forward.6} parent=0 // pred_region
    _
  $region21: #{block_forward.6} parent=0 // pred_fallthru
    _
  %v20 = vld [vmem:[%s0] sm:$0xff]
  %v21 = vld [vmem:[%s0 + $0x8] sm:$0xff]
  %v22 = vld [vmem:[%s0 + $0x10] sm:$0xff]
  %vm23 = vcmask 261120
  %v24 = vsel %vm23, %v20, 0.0
  %25 = vadd.xlane.f32.xlu0 %v24
  %v26 = vpop.xlane.xlu0 %25
  %v27 = vsel %vm23, %v21, 0.0
  %28 = vadd.xlane.f32.xlu0 %v27
  %v29 = vpop.xlane.xlu0 %28
  %v30 = vsel %vm23, %v22, 0.0
  %31 = vadd.xlane.f32.xlu0 %v30
  %v32 = vpop.xlane.xlu0 %31
  %v33 = vrcp.pop 32.0
  %v34 = vmul.f32 %v26, %v33
  %v35 = vmul.f32 %v29, %v33
  %v36 = vmul.f32 %v32, %v33
  %v37 = vsub.f32 %v20, %v34
  %v38 = vsub.f32 %v21, %v35
  %v39 = vsub.f32 %v22, %v36
  %v40 = vmul.f32 %v37, %v37
  %v41 = vmul.f32 %v38, %v38
  %v42 = vmul.f32 %v39, %v39
  %v43 = vsel %vm23, %v40, 0.0
  %44 = vadd.xlane.f32.xlu0 %v43
  %v45 = vpop.xlane.xlu0 %44
  %v46 = vsel %vm23, %v41, 0.0
  %47 = vadd.xlane.f32.xlu0 %v46
  %v48 = vpop.xlane.xlu0 %47
  %v49 = vsel %vm23, %v42, 0.0
  %50 = vadd.xlane.f32.xlu0 %v49
  %v51 = vpop.xlane.xlu0 %50
  %v52 = vmul.f32 %v45, %v33
  %v53 = vmul.f32 %v48, %v33
  %v54 = vmul.f32 %v51, %v33
  %v55 = vadd.f32 %v52, 1e-05
  %v56 = vadd.f32 %v53, 1e-05
  %v57 = vadd.f32 %v54, 1e-05
  %v58 = vrsqrt.pop %v55
  %v59 = vrsqrt.pop %v56
  %v60 = vrsqrt.pop %v57
  %v61 = vmul.f32 %v37, %v58
  %v62 = vmul.f32 %v38, %v59
  %v63 = vmul.f32 %v39, %v60
  %v64 = vld [vmem:[%s1] sm:$0x1]
  %v66 = vlaneseq
  %v67 = vshrl.u32 %v66, 7
  %v68 = vsub.s32 0, %v67
  %v69 = vrot.slane %v64, %v68
  %v71 = vmul.f32 %v61, %v69
  %v72 = vmul.f32 %v62, %v69
  %v73 = vmul.f32 %v63, %v69
  %v74 = vld [vmem:[%s2] sm:$0x1]
  %v76 = vlaneseq
  %v77 = vshrl.u32 %v76, 7
  %v78 = vsub.s32 0, %v77
  %v79 = vrot.slane %v74, %v78
  %v81 = vadd.f32 %v71, %v79
  %v82 = vadd.f32 %v72, %v79
  %v83 = vadd.f32 %v73, %v79
  %v84 = vld [vmem:[%s3] sm:$0xff]
  %v85 = vld [vmem:[%s3 + $0x8] sm:$0xff]
  %v86 = vld [vmem:[%s3 + $0x10] sm:$0xff]
  %v87 = vld [vmem:[%s3 + $0x18] sm:$0xff]
  %v88 = vld [vmem:[%s4] sm:$0x1]
  %v90 = vlaneseq
  %v91 = vshrl.u32 %v90, 7
  %v92 = vsub.s32 0, %v91
  %v93 = vrot.slane %v88, %v92
  %v96 = vsel %vm23, %v81, 0
  %v99 = vsel %vm23, %v82, 0
  %v102 = vsel %vm23, %v83, 0
  %104 = vmatprep.subr.mxu0 0.0
  %105 = vmatpush1.msra.mxu0 %v84
  %106 = vmatprep.subr.mxu0 0.0
  %107 = vmatpush1.msra.mxu0 %v85
  %108 = vmatprep.subr.mxu0 0.0
  %109 = vmatpush1.msra.mxu0 %v86
  %110 = vmatprep.subr.mxu0 0.0
  %111 = vmatpush1.msra.mxu0 %v87
  %112 = vmatprep.subr.mxu0 0.0
  %113 = vmatpush1.msra.mxu0 0.0
  %114 = vmatprep.subr.mxu0 0.0
  %115 = vmatpush1.msra.mxu0 0.0
  %116 = vmatprep.subr.mxu0 0.0
  %117 = vmatpush1.msra.mxu0 0.0
  %118 = vmatprep.subr.mxu0 0.0
  %119 = vmatpush1.msra.mxu0 0.0
  %120 = vmatprep.subr.mxu0 0.0
  %121 = vmatpush1.msra.mxu0 0.0
  %122 = vmatprep.subr.mxu0 0.0
  %123 = vmatpush1.msra.mxu0 0.0
  %124 = vmatprep.subr.mxu0 0.0
  %125 = vmatpush1.msra.mxu0 0.0
  %126 = vmatprep.subr.mxu0 0.0
  %127 = vmatpush1.msra.mxu0 0.0
  %128 = vmatprep.subr.mxu0 0.0
  %129 = vmatpush1.msra.mxu0 0.0
  %130 = vmatprep.subr.mxu0 0.0
  %131 = vmatpush1.msra.mxu0 0.0
  %132 = vmatprep.subr.mxu0 0.0
  %133 = vmatpush1.msra.mxu0 0.0
  %134 = vmatprep.subr.mxu0 0.0
  %135 = vmatpush1.msra.mxu0 0.0
  %136 = vmatprep.subr.mxu0 0.0
  %137 = vmatpush1.msra.mxu0 0.0
  %138 = vmatprep.subr.mxu0 0.0
  %139 = vmatpush1.msra.mxu0 0.0
  %140 = vmatprep.subr.mxu0 0.0
  %141 = vmatpush1.msra.mxu0 0.0
  %142 = vmatprep.subr.mxu0 0.0
  %143 = vmatpush1.msra.mxu0 0.0
  %144 = vmatprep.subr.mxu0 0.0
  %145 = vmatpush1.msra.mxu0 0.0
  %146 = vmatprep.subr.mxu0 0.0
  %147 = vmatpush1.msra.mxu0 0.0
  %148 = vmatprep.subr.mxu0 0.0
  %149 = vmatpush1.msra.mxu0 0.0
  %150 = vmatprep.subr.mxu0 0.0
  %151 = vmatpush1.msra.mxu0 0.0
  %152 = vmatprep.subr.mxu0 0.0
  %153 = vmatpush1.msra.mxu0 0.0
  %154 = vmatprep.subr.mxu0 0.0
  %155 = vmatpush1.msra.mxu0 0.0
  %156 = vmatprep.subr.mxu0 0.0
  %157 = vmatpush1.msra.mxu0 0.0
  %158 = vmatprep.subr.mxu0 0.0
  %159 = vmatpush1.msra.mxu0 0.0
  %160 = vmatprep.subr.mxu0 0.0
  %161 = vmatpush1.msra.mxu0 0.0
  %162 = vmatprep.subr.mxu0 0.0
  %163 = vmatpush1.msra.mxu0 0.0
  %164 = vmatprep.subr.mxu0 0.0
  %165 = vmatpush1.msra.mxu0 0.0
  %166 = vmatprep.subr.mxu0 0.0
  %167 = vmatpush1.msra.mxu0 0.0
  %168 = vmatprep.mubr.f32.mxu0 0.0
  %169 = vmatmul.mubr.f32.gmra.mrb[0].mxu0 %v96
  %v170 = vpop.f32.mrb[0].mxu0
  %v171 = vadd.f32 %v93, %v170
  %v172 = vpop.f32.mrb[0].mxu0
  %173 = vmatprep.mubr.f32.mxu0 0.0
  %174 = vmatmul.mubr.f32.gmra.mrb[0].mxu0 %v99
  %v175 = vpop.f32.mrb[0].mxu0
  %v176 = vadd.f32 %v93, %v175
  %v177 = vpop.f32.mrb[0].mxu0
  %178 = vmatprep.mubr.f32.mxu0 0.0
  %179 = vmatmul.mubr.f32.gmra.mrb[0].mxu0 %v102
  %v180 = vpop.f32.mrb[0].mxu0
  %v181 = vadd.f32 %v93, %v180
  %v182 = vpop.f32.mrb[0].mxu0
  %183 = vdwg.mxu0
  %v184 = vmul.f32 %v171, %v171
  %v185 = vmul.f32 %v176, %v176
  %v186 = vmul.f32 %v181, %v181
  %v187 = vmul.f32 %v171, %v184
  %v188 = vmul.f32 %v176, %v185
  %v189 = vmul.f32 %v181, %v186
  %v190 = vmul.f32 %v187, 0.044715
  %v191 = vmul.f32 %v188, 0.044715
  %v192 = vmul.f32 %v189, 0.044715
  %v193 = vadd.f32 %v171, %v190
  %v194 = vadd.f32 %v176, %v191
  %v195 = vadd.f32 %v181, %v192
  %v196 = vmul.f32 %v193, 0.7978846
  %v197 = vmul.f32 %v194, 0.7978846
  %v198 = vmul.f32 %v195, 0.7978846
  %v199 = vtanh.pop %v196
  %v200 = vtanh.pop %v197
  %v201 = vtanh.pop %v198
  %v202 = vadd.f32 %v199, 1.0
  %v203 = vadd.f32 %v200, 1.0
  %v204 = vadd.f32 %v201, 1.0
  %v205 = vmul.f32 %v202, 0.5
  %v206 = vmul.f32 %v203, 0.5
  %v207 = vmul.f32 %v204, 0.5
  %v208 = vmul.f32 %v171, %v205
  %v209 = vmul.f32 %v176, %v206
  %v210 = vmul.f32 %v181, %v207
  %211 = vst [vmem:[%s5] sm:$0xff] %v208
  %212 = vst [vmem:[%s5 + $0x8] sm:$0xff] %v209
  %213 = vst [vmem:[%s5 + $0x10] sm:$0xff] %v210
  // Predicated region
  $region22: #{block_forward.6} parent=0 // pred_check
    _
  $region23: #{block_forward.6} parent=0 // pred_check_branch
    %215 = sbr.rel (0) target = $region25
  $region24: #{block_forward.6} parent=0 // pred_region
    _
  $region25: #{block_forward.6} parent=0 // pred_fallthru
    _
  // Predicated region
  $region26: #{block_forward.6} parent=0 // pred_check
    _
  $region27: #{block_forward.6} parent=0 // pred_check_branch
    %217 = sbr.rel (0) target = $region29
  $region28: #{block_forward.6} parent=0 // pred_region
    _
  $region29: #{block_forward.6} parent=0 // pred_fallthru
    _

// kernel: block_forward.7
$region0: #{block_forward.7}
  #allocation0 [shape = 'u32[]', space=smem, size = 0x4, offset = 0x4, fixed_abs, tag = 'smem constant byte address 0x4 - core index']
  #allocation1 [shape = 'u32[144,128]{1,0:T(1,128)}', space=vmem, size = 0x12000, scoped, tag = 'internal scratch']
  #allocation2 [shape = 'f32[24,32]{1,0:T(8,128)}', space=vmem, size = 0x3000, scoped, tag = 'scratch operand']
  %s0 = inlined_call_operand.vmem [shape: f32[24,128], index: 0, kind: input, shape index: {}]
  %s1 = inlined_call_operand.vmem [shape: f32[128,32], index: 1, kind: input, shape index: {}]
  %s2 = inlined_call_operand.vmem [shape: f32[1,32], index: 2, kind: input, shape index: {}]
  %s3 = inlined_call_operand.vmem [shape: f32[24,32], index: 3, kind: input, shape index: {}]
  %s4 = inlined_call_operand.vmem [shape: f32[24,32], index: 4, kind: output, shape index: {}]
  %s5 = sld [smem:[#allocation0]]
  $region34: #{block_forward.7} parent=0
    _
  %s7 = ssub.s32 1, %s5
  %s8 = scalar_select 0, %s7, %s5
  // Predicated region
  $region2: #{block_forward.7} parent=0 // pred_check
    _
  $region3: #{block_forward.7} parent=0 // pred_check_branch
    %10 = sbr.rel (0) target = $region5
  $region4: #{block_forward.7} parent=0 // pred_region
    _
  $region5: #{block_forward.7} parent=0 // pred_fallthru
    _
  // Predicated region
  $region6: #{block_forward.7} parent=0 // pred_check
    _
  $region7: #{block_forward.7} parent=0 // pred_check_branch
    %12 = sbr.rel (0) target = $region9
  $region8: #{block_forward.7} parent=0 // pred_region
    _
  $region9: #{block_forward.7} parent=0 // pred_fallthru
    _
  // Predicated region
  $region10: #{block_forward.7} parent=0 // pred_check
    _
  $region11: #{block_forward.7} parent=0 // pred_check_branch
    %14 = sbr.rel (0) target = $region13
  $region12: #{block_forward.7} parent=0 // pred_region
    _
  $region13: #{block_forward.7} parent=0 // pred_fallthru
    _
  // Predicated region
  $region14: #{block_forward.7} parent=0 // pred_check
    _
  $region15: #{block_forward.7} parent=0 // pred_check_branch
    %16 = sbr.rel (0) target = $region17
  $region16: #{block_forward.7} parent=0 // pred_region
    _
  $region17: #{block_forward.7} parent=0 // pred_fallthru
    _
  %p17 = scmp.eq.s32.totalorder 0, 0
  // Predicated region
  $region18: #{block_forward.7} parent=0 // pred_check
    %p18 = pneg %p17
  $region19: #{block_forward.7} parent=0 // pred_check_branch
    %20 = sbr.rel (%p18) target = $region21
  $region20: #{block_forward.7} parent=0 // pred_region
    %vm21 = vcmask 261120
    %22 = vst.msk [vmem:[#allocation2] sm:$0xff] %vm21, 0.0
    %23 = vst.msk [vmem:[#allocation2 + $0x8] sm:$0xff] %vm21, 0.0
    %24 = vst.msk [vmem:[#allocation2 + $0x10] sm:$0xff] %vm21, 0.0
  $region21: #{block_forward.7} parent=0 // pred_fallthru
    _
  %v25 = vld [vmem:[#allocation2] sm:$0xff]
  %v26 = vld [vmem:[#allocation2 + $0x8] sm:$0xff]
  %v27 = vld [vmem:[#allocation2 + $0x10] sm:$0xff]
  %v28 = vld [vmem:[%s0] sm:$0xff]
  %v29 = vld [vmem:[%s0 + $0x8] sm:$0xff]
  %v30 = vld [vmem:[%s0 + $0x10] sm:$0xff]
  %v31 = vld [vmem:[%s1] sm:$0xff]
  %v32 = vld [vmem:[%s1 + $0x8] sm:$0xff]
  %v33 = vld [vmem:[%s1 + $0x10] sm:$0xff]
  %v34 = vld [vmem:[%s1 + $0x18] sm:$0xff]
  %v35 = vld [vmem:[%s1 + $0x20] sm:$0xff]
  %v36 = vld [vmem:[%s1 + $0x28] sm:$0xff]
  %v37 = vld [vmem:[%s1 + $0x30] sm:$0xff]
  %v38 = vld [vmem:[%s1 + $0x38] sm:$0xff]
  %v39 = vld [vmem:[%s1 + $0x40] sm:$0xff]
  %v40 = vld [vmem:[%s1 + $0x48] sm:$0xff]
  %v41 = vld [vmem:[%s1 + $0x50] sm:$0xff]
  %v42 = vld [vmem:[%s1 + $0x58] sm:$0xff]
  %v43 = vld [vmem:[%s1 + $0x60] sm:$0xff]
  %v44 = vld [vmem:[%s1 + $0x68] sm:$0xff]
  %v45 = vld [vmem:[%s1 + $0x70] sm:$0xff]
  %v46 = vld [vmem:[%s1 + $0x78] sm:$0xff]
  %47 = vmatprep.subr.mxu0 0.0
  %48 = vmatpush1.msra.mxu0 %v31
  %49 = vmatprep.subr.mxu0 0.0
  %50 = vmatpush1.msra.mxu0 %v32
  %51 = vmatprep.subr.mxu0 0.0
  %52 = vmatpush1.msra.mxu0 %v33
  %53 = vmatprep.subr.mxu0 0.0
  %54 = vmatpush1.msra.mxu0 %v34
  %55 = vmatprep.subr.mxu0 0.0
  %56 = vmatpush1.msra.mxu0 %v35
  %57 = vmatprep.subr.mxu0 0.0
  %58 = vmatpush1.msra.mxu0 %v36
  %59 = vmatprep.subr.mxu0 0.0
  %60 = vmatpush1.msra.mxu0 %v37
  %61 = vmatprep.subr.mxu0 0.0
  %62 = vmatpush1.msra.mxu0 %v38
  %63 = vmatprep.subr.mxu0 0.0
  %64 = vmatpush1.msra.mxu0 %v39
  %65 = vmatprep.subr.mxu0 0.0
  %66 = vmatpush1.msra.mxu0 %v40
  %67 = vmatprep.subr.mxu0 0.0
  %68 = vmatpush1.msra.mxu0 %v41
  %69 = vmatprep.subr.mxu0 0.0
  %70 = vmatpush1.msra.mxu0 %v42
  %71 = vmatprep.subr.mxu0 0.0
  %72 = vmatpush1.msra.mxu0 %v43
  %73 = vmatprep.subr.mxu0 0.0
  %74 = vmatpush1.msra.mxu0 %v44
  %75 = vmatprep.subr.mxu0 0.0
  %76 = vmatpush1.msra.mxu0 %v45
  %77 = vmatprep.subr.mxu0 0.0
  %78 = vmatpush1.msra.mxu0 %v46
  %79 = vmatprep.subr.mxu0 0.0
  %80 = vmatpush1.msra.mxu0 0.0
  %81 = vmatprep.subr.mxu0 0.0
  %82 = vmatpush1.msra.mxu0 0.0
  %83 = vmatprep.subr.mxu0 0.0
  %84 = vmatpush1.msra.mxu0 0.0
  %85 = vmatprep.subr.mxu0 0.0
  %86 = vmatpush1.msra.mxu0 0.0
  %87 = vmatprep.subr.mxu0 0.0
  %88 = vmatpush1.msra.mxu0 0.0
  %89 = vmatprep.subr.mxu0 0.0
  %90 = vmatpush1.msra.mxu0 0.0
  %91 = vmatprep.subr.mxu0 0.0
  %92 = vmatpush1.msra.mxu0 0.0
  %93 = vmatprep.subr.mxu0 0.0
  %94 = vmatpush1.msra.mxu0 0.0
  %95 = vmatprep.subr.mxu0 0.0
  %96 = vmatpush1.msra.mxu0 0.0
  %97 = vmatprep.subr.mxu0 0.0
  %98 = vmatpush1.msra.mxu0 0.0
  %99 = vmatprep.subr.mxu0 0.0
  %100 = vmatpush1.msra.mxu0 0.0
  %101 = vmatprep.subr.mxu0 0.0
  %102 = vmatpush1.msra.mxu0 0.0
  %103 = vmatprep.subr.mxu0 0.0
  %104 = vmatpush1.msra.mxu0 0.0
  %105 = vmatprep.subr.mxu0 0.0
  %106 = vmatpush1.msra.mxu0 0.0
  %107 = vmatprep.subr.mxu0 0.0
  %108 = vmatpush1.msra.mxu0 0.0
  %109 = vmatprep.subr.mxu0 0.0
  %110 = vmatpush1.msra.mxu0 0.0
  %111 = vmatprep.mubr.f32.mxu0 0.0
  %112 = vmatmul.mubr.f32.gmra.mrb[0].mxu0 %v28
  %v113 = vpop.f32.mrb[0].mxu0
  %v114 = vadd.f32 0.0, %v113
  %v115 = vpop.f32.mrb[0].mxu0
  %116 = vmatprep.mubr.f32.mxu0 0.0
  %117 = vmatmul.mubr.f32.gmra.mrb[0].mxu0 %v29
  %v118 = vpop.f32.mrb[0].mxu0
  %v119 = vadd.f32 0.0, %v118
  %v120 = vpop.f32.mrb[0].mxu0
  %121 = vmatprep.mubr.f32.mxu0 0.0
  %122 = vmatmul.mubr.f32.gmra.mrb[0].mxu0 %v30
  %v123 = vpop.f32.mrb[0].mxu0
  %v124 = vadd.f32 0.0, %v123
  %v125 = vpop.f32.mrb[0].mxu0
  %126 = vdwg.mxu0
  %v127 = vadd.f32 %v25, %v114
  %v128 = vadd.f32 %v26, %v119
  %v129 = vadd.f32 %v27, %v124
  %vm130 = vcmask 261120
  %131 = vst.msk [vmem:[#allocation2] sm:$0xff] %vm130, %v127
  %132 = vst.msk [vmem:[#allocation2 + $0x8] sm:$0xff] %vm130, %v128
  %133 = vst.msk [vmem:[#allocation2 + $0x10] sm:$0xff] %vm130, %v129
  // Predicated region
  $region22: #{block_forward.7} parent=0 // pred_check
    %p134 = pneg %p17
  $region23: #{block_forward.7} parent=0 // pred_check_branch
    %136 = sbr.rel (%p134) target = $region25
  $region24: #{block_forward.7} parent=0 // pred_region
    %v137 = vld [vmem:[#allocation2] sm:$0xff]
    %v138 = vld [vmem:[#allocation2 + $0x8] sm:$0xff]
    %v139 = vld [vmem:[#allocation2 + $0x10] sm:$0xff]
    %v140 = vld [vmem:[%s2] sm:$0x1]
    %v142 = vlaneseq
    %v143 = vshrl.u32 %v142, 7
    %v144 = vsub.s32 0, %v143
    %v145 = vrot.slane %v140, %v144
    %v147 = vadd.f32 %v137, %v145
    %v148 = vadd.f32 %v138, %v145
    %v149 = vadd.f32 %v139, %v145
    %v150 = vld [vmem:[%s3] sm:$0xff]
    %v151 = vld [vmem:[%s3 + $0x8] sm:$0xff]
    %v152 = vld [vmem:[%s3 + $0x10] sm:$0xff]
    %v153 = vadd.f32 %v147, %v150
    %v154 = vadd.f32 %v148, %v151
    %v155 = vadd.f32 %v149, %v152
    %156 = vst.msk [vmem:[%s4] sm:$0xff] %vm130, %v153
    %157 = vst.msk [vmem:[%s4 + $0x8] sm:$0xff] %vm130, %v154
    %158 = vst.msk [vmem:[%s4 + $0x10] sm:$0xff] %vm130, %v155
  $region25: #{block_forward.7} parent=0 // pred_fallthru
    _
  // Predicated region
  $region26: #{block_forward.7} parent=0 // pred_check
    _
  $region27: #{block_forward.7} parent=0 // pred_check_branch
    %160 = sbr.rel (0) target = $region29
  $region28: #{block_forward.7} parent=0 // pred_region
    _
  $region29: #{block_forward.7} parent=0 // pred_fallthru
    _
  // Predicated region
  $region30: #{block_forward.7} parent=0 // pred_check
    _
  $region31: #{block_forward.7} parent=0 // pred_check_branch
    %162 = sbr.rel (0) target = $region33
  $region32: #{block_forward.7} parent=0 // pred_region
    _
  $region33: #{block_forward.7} parent=0 // pred_fallthru
    _

// kernel: block_forward.5
$region0: #{block_forward.5}
  #allocation0 [shape = 'u32[]', space=smem, size = 0x4, offset = 0x4, fixed_abs, tag = 'smem constant byte address 0x4 - core index']
  #allocation1 [shape = 'u32[144,128]{1,0:T(1,128)}', space=vmem, size = 0x12000, scoped, tag = 'internal scratch']
  %s0 = inlined_call_operand.vmem [shape: f32[2,12,96], index: 0, kind: input, shape index: {}]
  %s1 = inlined_call_operand.vmem [shape: f32[2,12,32], index: 1, kind: input, shape index: {}]
  %s2 = inlined_call_operand.vmem [shape: f32[32,32], index: 2, kind: input, shape index: {}]
  %s3 = inlined_call_operand.vmem [shape: f32[1,32], index: 3, kind: input, shape index: {}]
  %s4 = inlined_call_operand.vmem [shape: f32[2,12,32], index: 4, kind: output, shape index: {}]
  %s5 = sld [smem:[#allocation0]]
  $region49: #{block_forward.5} parent=0
    _
  %s7 = ssub.s32 1, %s5
  %s8 = scalar_select 0, %s7, %s5
  loop: start=0, step=1, limit=6
  $region2: #{block_forward.5} parent=0 // loop_pre_header
    _
  $region3: #{block_forward.5} parent=0 // loop_header
    %s10 = sphi 0, %s14
    %p11 = scmp.ge.s32.totalorder %s10, 6
    %s17 = sphi 0, %s29
    %s18 = sphi 0, %s25
    %s19 = sphi 0, %s17
    %s20 = sphi 0, %s18
    %s21 = sphi 0, %s19
    %s22 = sphi 0, %s20
    %s34 = sphi 0, %s36
    %s37 = sphi 0, %s34
    %s38 = sphi 0, %s37
    %s54 = sphi 0, %s38
    %s62 = sphi 0, %s64
    %s65 = sphi 0, %s62
    %s66 = sphi 0, %s65
    %s82 = sphi 0, %s66
    %s86 = sphi 0, %s86
    %s88 = sphi 0, %s86
    %s89 = sphi 0, %s88
    %s103 = sphi 0, %s89
    %s107 = sphi 0, %s107
    %s109 = sphi 0, %s107
    %s110 = sphi 0, %s109
    %s124 = sphi 0, %s110
    %s132 = sphi 0, %s134
    %s135 = sphi 0, %s132
    %s136 = sphi 0, %s135
    %s152 = sphi 0, %s136
  $region4: #{block_forward.5} parent=0 // loop_header_branch
    %13 = sbr.rel (%p11) target = $region8
  $region5: #{block_forward.5} parent=0 // loop_body
    %s15 = ssub.s32 %s10, 1
    %s16 = ssub.s32 %s10, 2
    %s23 = sadd.s32 1, %s18
    %p24 = scmp.ge.s32.totalorder %s23, 2
    %s25 = scalar_select %p24, 0, %s23
    %s26 = sadd.s32 1, %s17
    %s27 = scalar_select %p24, %s26, %s17
    %p28 = scmp.ge.s32.totalorder %s27, 2
    %s29 = scalar_select %p28, 0, %s27
    %s30 = ssub.s32 %s17, %s29
    %s31 = ssub.s32 %s18, %s25
    %s32 = sor.u32 %s30, %s31
    %p33 = scmp.eq.s32.totalorder %s32, 0
    %s35 = sadd.s32 %s34, 1
    %s36 = scalar_select %p33, %s34, %s35
    %p39 = pneg %p33
    %p40 = scmp.eq.s32.totalorder %s10, 3
    %p41 = por %p39, %p40
    %p42 = scmp.ne.s32.totalorder %s34, %s37
    %p43 = scmp.eq.s32.totalorder %s10, 0
    %p44 = por %p42, %p43
    %p45 = scmp.ne.s32.totalorder %s34, %s37
    %p46 = scmp.eq.s32.totalorder %s15, 3
    %p47 = por %p45, %p46
    %p48 = scmp.ne.s32.totalorder %s37, %s38
    %p49 = scmp.eq.s32.totalorder %s15, 0
    %p50 = por %p48, %p49
    %p51 = scmp.ne.s32.totalorder %s37, %s38
    %p52 = scmp.eq.s32.totalorder %s16, 3
    %p53 = por %p51, %p52
    %p55 = scmp.ne.s32.totalorder %s38, %s54
    %p56 = scmp.eq.s32.totalorder %s16, 0
    %p57 = por %p55, %p56
    %s58 = ssub.s32 %s17, %s29
    %s59 = ssub.s32 %s18, %s25
    %s60 = sor.u32 %s58, %s59
    %p61 = scmp.eq.s32.totalorder %s60, 0
    %s63 = sadd.s32 %s62, 1
    %s64 = scalar_select %p61, %s62, %s63
    %p67 = pneg %p61
    %p68 = scmp.eq.s32.totalorder %s10, 3
    %p69 = por %p67, %p68
    %p70 = scmp.ne.s32.totalorder %s62, %s65
    %p71 = scmp.eq.s32.totalorder %s10, 0
    %p72 = por %p70, %p71
    %p73 = scmp.ne.s32.totalorder %s62, %s65
    %p74 = scmp.eq.s32.totalorder %s15, 3
    %p75 = por %p73, %p74
    %p76 = scmp.ne.s32.totalorder %s65, %s66
    %p77 = scmp.eq.s32.totalorder %s15, 0
    %p78 = por %p76, %p77
    %p79 = scmp.ne.s32.totalorder %s65, %s66
    %p80 = scmp.eq.s32.totalorder %s16, 3
    %p81 = por %p79, %p80
    %p83 = scmp.ne.s32.totalorder %s66, %s82
    %p84 = scmp.eq.s32.totalorder %s16, 0
    %p85 = por %p83, %p84
    %s87 = sadd.s32 %s86, 1
    %p90 = scmp.eq.s32.totalorder %s10, 3
    %p91 = scmp.ne.s32.totalorder %s86, %s88
    %p92 = scmp.eq.s32.totalorder %s10, 0
    %p93 = por %p91, %p92
    %p94 = scmp.ne.s32.totalorder %s86, %s88
    %p95 = scmp.eq.s32.totalorder %s15, 3
    %p96 = por %p94, %p95
    %p97 = scmp.ne.s32.totalorder %s88, %s89
    %p98 = scmp.eq.s32.totalorder %s15, 0
    %p99 = por %p97, %p98
    %p100 = scmp.ne.s32.totalorder %s88, %s89
    %p101 = scmp.eq.s32.totalorder %s16, 3
    %p102 = por %p100, %p101
    %p104 = scmp.ne.s32.totalorder %s89, %s103
    %p105 = scmp.eq.s32.totalorder %s16, 0
    %p106 = por %p104, %p105
    %s108 = sadd.s32 %s107, 1
    %p111 = scmp.eq.s32.totalorder %s10, 3
    %p112 = scmp.ne.s32.totalorder %s107, %s109
    %p113 = scmp.eq.s32.totalorder %s10, 0
    %p114 = por %p112, %p113
    %p115 = scmp.ne.s32.totalorder %s107, %s109
    %p116 = scmp.eq.s32.totalorder %s15, 3
    %p117 = por %p115, %p116
    %p118 = scmp.ne.s32.totalorder %s109, %s110
    %p119 = scmp.eq.s32.totalorder %s15, 0
    %p120 = por %p118, %p119
    %p121 = scmp.ne.s32.totalorder %s109, %s110
    %p122 = scmp.eq.s32.totalorder %s16, 3
    %p123 = por %p121, %p122
    %p125 = scmp.ne.s32.totalorder %s110, %s124
    %p126 = scmp.eq.s32.totalorder %s16, 0
    %p127 = por %p125, %p126
    %s128 = ssub.s32 %s17, %s29
    %s129 = ssub.s32 %s18, %s25
    %s130 = sor.u32 %s128, %s129
    %p131 = scmp.eq.s32.totalorder %s130, 0
    %s133 = sadd.s32 %s132, 1
    %s134 = scalar_select %p131, %s132, %s133
    %p137 = pneg %p131
    %p138 = scmp.eq.s32.totalorder %s10, 3
    %p139 = por %p137, %p138
    %p140 = scmp.ne.s32.totalorder %s132, %s135
    %p141 = scmp.eq.s32.totalorder %s10, 0
    %p142 = por %p140, %p141
    %p143 = scmp.ne.s32.totalorder %s132, %s135
    %p144 = scmp.eq.s32.totalorder %s15, 3
    %p145 = por %p143, %p144
    %p146 = scmp.ne.s32.totalorder %s135, %s136
    %p147 = scmp.eq.s32.totalorder %s15, 0
    %p148 = por %p146, %p147
    %p149 = scmp.ne.s32.totalorder %s135, %s136
    %p150 = scmp.eq.s32.totalorder %s16, 3
    %p151 = por %p149, %p150
    %p153 = scmp.ne.s32.totalorder %s136, %s152
    %p154 = scmp.eq.s32.totalorder %s16, 0
    %p155 = por %p153, %p154
    %p156 = scmp.le.s32.totalorder 1, %s10
    %p157 = scmp.lt.s32.totalorder %s10, 5
    %p158 = pnand %p156, %p157
    %p159 = pneg %p158
    // Predicated region
    $region9: #{block_forward.5} parent=5 // pred_check
      _
    $region10: #{block_forward.5} parent=5 // pred_check_branch
      %161 = sbr.rel (%p158) target = $region12
    $region11: #{block_forward.5} parent=5 // pred_region
      %s162 = ssub.s32 %s10, 1
      // Predicated region
      $region13: #{block_forward.5} parent=11 // pred_check
        %p163 = pneg %p99
      $region14: #{block_forward.5} parent=11 // pred_check_branch
        %165 = sbr.rel (%p163) target = $region16
      $region15: #{block_forward.5} parent=11 // pred_region
        _
      $region16: #{block_forward.5} parent=11 // pred_fallthru
        _
      // Predicated region
      $region17: #{block_forward.5} parent=11 // pred_check
        %p166 = pneg %p120
      $region18: #{block_forward.5} parent=11 // pred_check_branch
        %168 = sbr.rel (%p166) target = $region20
      $region19: #{block_forward.5} parent=11 // pred_region
        _
      $region20: #{block_forward.5} parent=11 // pred_fallthru
        _
    $region12: #{block_forward.5} parent=5 // pred_fallthru
      _
    %p169 = scmp.lt.s32.totalorder %s10, 4
    // Predicated region
    $region21: #{block_forward.5} parent=5 // pred_check
      %p170 = pneg %p169
    $region22: #{block_forward.5} parent=5 // pred_check_branch
      %172 = sbr.rel (%p170) target = $region24
    $region23: #{block_forward.5} parent=5 // pred_region
      // Predicated region
      $region25: #{block_forward.5} parent=23 // pred_check
        %p173 = pneg %p44
      $region26: #{block_forward.5} parent=23 // pred_check_branch
        %175 = sbr.rel (%p173) target = $region28
      $region27: #{block_forward.5} parent=23 // pred_region
        %p176 = scmp.lt.s32.totalorder %s17, 1
        %s177 = scalar_select %p176, %s17, 1
        %p178 = scmp.lt.s32.totalorder %s18, 1
        %s179 = scalar_select %p178, %s18, 1
        %s180 = smul.addr %s177, 2
        %s181 = sadd.s32 %s179, %s180
        %s182 = smul.addr %s181, 8
        %s183 = scalar_lea.vmem %s0, %s182
      $region28: #{block_forward.5} parent=23 // pred_fallthru
        _
      // Predicated region
      $region29: #{block_forward.5} parent=23 // pred_check
        %p184 = pneg %p72
      $region30: #{block_forward.5} parent=23 // pred_check_branch
        %186 = sbr.rel (%p184) target = $region32
      $region31: #{block_forward.5} parent=23 // pred_region
        %p187 = scmp.lt.s32.totalorder %s17, 1
        %s188 = scalar_select %p187, %s17, 1
        %p189 = scmp.lt.s32.totalorder %s18, 1
        %s190 = scalar_select %p189, %s18, 1
        %s191 = smul.addr %s188, 2
        %s192 = sadd.s32 %s190, %s191
        %s193 = smul.addr %s192, 8
        %s194 = scalar_lea.vmem %s1, %s193
      $region32: #{block_forward.5} parent=23 // pred_fallthru
        _
    $region24: #{block_forward.5} parent=5 // pred_fallthru
      _
    %p195 = scmp.le.s32.totalorder 1, %s10
    %p196 = scmp.lt.s32.totalorder %s10, 5
    %p197 = pnand %p195, %p196
    %p198 = pneg %p197
    // Predicated region
    $region33: #{block_forward.5} parent=5 // pred_check
      _
    $region34: #{block_forward.5} parent=5 // pred_check_branch
      %200 = sbr.rel (%p197) target = $region36
    $region35: #{block_forward.5} parent=5 // pred_region
      %s201 = ssub.s32 %s10, 1
      %p202 = scmp.lt.s32.totalorder %s19, 1
      %s203 = scalar_select %p202, %s19, 1
      %p204 = scmp.lt.s32.totalorder %s20, 1
      %s205 = scalar_select %p204, %s20, 1
      %s206 = smul.addr %s203, 2
      %s207 = sadd.s32 %s205, %s206
      %s208 = smul.addr %s207, 8
      %s209 = scalar_lea.vmem %s0, %s208
      %p210 = pneg %p50
      %p211 = pneg %p47
      %p212 = scmp.lt.s32.totalorder %s19, 1
      %s213 = scalar_select %p212, %s19, 1
      %p214 = scmp.lt.s32.totalorder %s20, 1
      %s215 = scalar_select %p214, %s20, 1
      %s216 = smul.addr %s213, 2
      %s217 = sadd.s32 %s215, %s216
      %s218 = smul.addr %s217, 8
      %s219 = scalar_lea.vmem %s1, %s218
      %p220 = pneg %p78
      %p221 = pneg %p75
      %p222 = pneg %p99
      %p223 = pneg %p96
      %p224 = pneg %p120
      %p225 = pneg %p117
      %p226 = pneg %p148
      %p227 = pneg %p145
      %p228 = scmp.lt.s32.totalorder %s19, 1
      %s229 = scalar_select %p228, %s19, 1
      %p230 = scmp.lt.s32.totalorder %s20, 1
      %s231 = scalar_select %p230, %s20, 1
      %s232 = smul.addr %s229, 2
      %s233 = sadd.s32 %s231, %s232
      %s234 = smul.addr %s233, 8
      %s235 = scalar_lea.vmem %s4, %s234
      %p236 = scmp.lt.s32.totalorder %s19, 1
      %s237 = scalar_select %p236, %s19, 1
      %p238 = scmp.lt.s32.totalorder %s20, 1
      %s239 = scalar_select %p238, %s20, 1
      %s240 = smul.addr %s237, 2
      %s241 = sadd.s32 %s239, %s240
      %s242 = smul.addr %s241, 8
      %s243 = scalar_lea.vmem %s0, %s242
      %p244 = scmp.lt.s32.totalorder %s19, 1
      %s245 = scalar_select %p244, %s19, 1
      %p246 = scmp.lt.s32.totalorder %s20, 1
      %s247 = scalar_select %p246, %s20, 1
      %s248 = smul.addr %s245, 2
      %s249 = sadd.s32 %s247, %s248
      %s250 = smul.addr %s249, 8
      %s251 = scalar_lea.vmem %s1, %s250
      %p252 = scmp.lt.s32.totalorder %s19, 1
      %s253 = scalar_select %p252, %s19, 1
      %p254 = scmp.lt.s32.totalorder %s20, 1
      %s255 = scalar_select %p254, %s20, 1
      %s256 = smul.addr %s253, 2
      %s257 = sadd.s32 %s255, %s256
      %s258 = smul.addr %s257, 8
      %s259 = scalar_lea.vmem %s4, %s258
      %s260 = smul.u32 %s20, 8
      %v261 = vlaneseq
      %v262 = vshrl.u32 %v261, 7
      %v263 = vstv %s260
      %v264 = vadd.s32 %v263, %v262
      %v265 = vlaneseq
      %v266 = vand.u32 %v265, 127
      %v267 = vadd.s32 %v263, %v266
      %vm268 = vcmp.le.s32.totalorder %v267, %v264
      %vm269 = vcmp.lt.s32.totalorder %v267, 12
      %vm270 = vmand %vm268, %vm269
      %vm271 = vcmp.lt.s32.totalorder %v264, 12
      %v272 = vld [vmem:[%s3] sm:$0x1]
      %v273 = vld [vmem:[%s251] sm:$0xff]
      %v275 = vlaneseq
      %v276 = vshrl.u32 %v275, 7
      %v277 = vsub.s32 0, %v276
      %v278 = vrot.slane %v272, %v277
      %v280 = vadd.f32 %v278, %v273
      %v281 = vld [vmem:[%s243] sm:$0xff]
      %v282 = vmul.f32 %v281, 0.35355338
      %v283 = vsel %vm271, 1, 0
      %vm284 = vcmp.eq.s32.totalorder %v283, 1
      %v285 = vsel %vm284, %v281, 0.0
      %287 = vrot.lane.b32.xlu0 %v281, 96
      %v288 = vpop.permute.xlu0 %287
      %vm289 = vcmask 64512
      %v291 = vsel %vm289, %v282, 0
      %v293 = vsel %vm289, %v288, 0
      %295 = vmatprep.subr.mxu0 0.0
      %296 = vmatpush1.xpose.msra.mxu0 %v293
      %297 = vmatprep.subr.mxu0 0.0
      %298 = vmatpush1.xpose.msra.mxu0 0.0
      %299 = vmatprep.subr.mxu0 0.0
      %300 = vmatpush1.xpose.msra.mxu0 0.0
      %301 = vmatprep.subr.mxu0 0.0
      %302 = vmatpush1.xpose.msra.mxu0 0.0
      %303 = vmatprep.subr.mxu0 0.0
      %304 = vmatpush1.xpose.msra.mxu0 0.0
      %305 = vmatprep.subr.mxu0 0.0
      %306 = vmatpush1.xpose.msra.mxu0 0.0
      %307 = vmatprep.subr.mxu0 0.0
      %308 = vmatpush1.xpose.msra.mxu0 0.0
      %309 = vmatprep.subr.mxu0 0.0
      %310 = vmatpush1.xpose.msra.mxu0 0.0
      %311 = vmatprep.subr.mxu0 0.0
      %312 = vmatpush1.xpose.msra.mxu0 0.0
      %313 = vmatprep.subr.mxu0 0.0
      %314 = vmatpush1.xpose.msra.mxu0 0.0
      %315 = vmatprep.subr.mxu0 0.0
      %316 = vmatpush1.xpose.msra.mxu0 0.0
      %317 = vmatprep.subr.mxu0 0.0
      %318 = vmatpush1.xpose.msra.mxu0 0.0
      %319 = vmatprep.subr.mxu0 0.0
      %320 = vmatpush1.xpose.msra.mxu0 0.0
      %321 = vmatprep.subr.mxu0 0.0
      %322 = vmatpush1.xpose.msra.mxu0 0.0
      %323 = vmatprep.subr.mxu0 0.0
      %324 = vmatpush1.xpose.msra.mxu0 0.0
      %325 = vmatprep.subr.mxu0 0.0
      %326 = vmatpush1.xpose.msra.mxu0 0.0
      %327 = vmatprep.subr.mxu0 0.0
      %328 = vmatpush1.xpose.msra.mxu0 0.0
      %329 = vmatprep.subr.mxu0 0.0
      %330 = vmatpush1.xpose.msra.mxu0 0.0
      %331 = vmatprep.subr.mxu0 0.0
      %332 = vmatpush1.xpose.msra.mxu0 0.0
      %333 = vmatprep.subr.mxu0 0.0
      %334 = vmatpush1.xpose.msra.mxu0 0.0
      %335 = vmatprep.subr.mxu0 0.0
      %336 = vmatpush1.xpose.msra.mxu0 0.0
      %337 = vmatprep.subr.mxu0 0.0
      %338 = vmatpush1.xpose.msra.mxu0 0.0
      %339 = vmatprep.subr.mxu0 0.0
      %340 = vmatpush1.xpose.msra.mxu0 0.0
      %341 = vmatprep.subr.mxu0 0.0
      %342 = vmatpush1.xpose.msra.mxu0 0.0
      %343 = vmatprep.subr.mxu0 0.0
      %344 = vmatpush1.xpose.msra.mxu0 0.0
      %345 = vmatprep.subr.mxu0 0.0
      %346 = vmatpush1.xpose.msra.mxu0 0.0
      %347 = vmatprep.subr.mxu0 0.0
      %348 = vmatpush1.xpose.msra.mxu0 0.0
      %349 = vmatprep.subr.mxu0 0.0
      %350 = vmatpush1.xpose.msra.mxu0 0.0
      %351 = vmatprep.subr.mxu0 0.0
      %352 = vmatpush1.xpose.msra.mxu0 0.0
      %353 = vmatprep.subr.mxu0 0.0
      %354 = vmatpush1.xpose.msra.mxu0 0.0
      %355 = vmatprep.subr.mxu0 0.0
      %356 = vmatpush1.xpose.msra.mxu0 0.0
      %357 = vmatprep.subr.mxu0 0.0
      %358 = vmatpush1.xpose.msra.mxu0 0.0
      %359 = vmatprep.mubr.f32.mxu0 0.0
      %360 = vmatmul.mubr.f32.gmra.mrb[0].mxu0 %v291
      %v361 = vpop.f32.mrb[0].mxu0
      %v362 = vadd.f32 0.0, %v361
      %v363 = vpop.f32.mrb[0].mxu0
      %364 = vdwg.mxu0
      %v365 = vsel %vm270, %v362, -1e+30
      %v366 = vsel %vm289, %v365, -inf
      %367 = vmax.xlane.f32.xlu0 %v366
      %v368 = vpop.xlane.xlu0 %367
      %v369 = vsub.f32 %v365, %v368
      %v370 = vmul.f32 %v369, 1.442695
      %v371 = vpow.pop %v370
      %v372 = vsel %vm289, %v371, 0.0
      %373 = vadd.xlane.f32.xlu0 %v372
      %v374 = vpop.xlane.xlu0 %373
      %v375 = vrcp.pop %v374
      %v376 = vmul.f32 %v371, %v375
      %378 = vrot.lane.b32.xlu0 %v285, 64
      %v379 = vpop.permute.xlu0 %378
      %v382 = vsel %vm289, %v376, 0
      %384 = vmatprep.subr.mxu0 0.0
      %385 = vmatpush1.msra.mxu0 %v379
      %386 = vmatprep.subr.mxu0 0.0
      %387 = vmatpush1.msra.mxu0 0.0
      %388 = vmatprep.subr.mxu0 0.0
      %389 = vmatpush1.msra.mxu0 0.0
      %390 = vmatprep.subr.mxu0 0.0
      %391 = vmatpush1.msra.mxu0 0.0
      %392 = vmatprep.subr.mxu0 0.0
      %393 = vmatpush1.msra.mxu0 0.0
      %394 = vmatprep.subr.mxu0 0.0
      %395 = vmatpush1.msra.mxu0 0.0
      %396 = vmatprep.subr.mxu0 0.0
      %397 = vmatpush1.msra.mxu0 0.0
      %398 = vmatprep.subr.mxu0 0.0
      %399 = vmatpush1.msra.mxu0 0.0
      %400 = vmatprep.subr.mxu0 0.0
      %401 = vmatpush1.msra.mxu0 0.0
      %402 = vmatprep.subr.mxu0 0.0
      %403 = vmatpush1.msra.mxu0 0.0
      %404 = vmatprep.subr.mxu0 0.0
      %405 = vmatpush1.msra.mxu0 0.0
      %406 = vmatprep.subr.mxu0 0.0
      %407 = vmatpush1.msra.mxu0 0.0
      %408 = vmatprep.subr.mxu0 0.0
      %409 = vmatpush1.msra.mxu0 0.0
      %410 = vmatprep.subr.mxu0 0.0
      %411 = vmatpush1.msra.mxu0 0.0
      %412 = vmatprep.subr.mxu0 0.0
      %413 = vmatpush1.msra.mxu0 0.0
      %414 = vmatprep.subr.mxu0 0.0
      %415 = vmatpush1.msra.mxu0 0.0
      %416 = vmatprep.subr.mxu0 0.0
      %417 = vmatpush1.msra.mxu0 0.0
      %418 = vmatprep.subr.mxu0 0.0
      %419 = vmatpush1.msra.mxu0 0.0
      %420 = vmatprep.subr.mxu0 0.0
      %421 = vmatpush1.msra.mxu0 0.0
      %422 = vmatprep.subr.mxu0 0.0
      %423 = vmatpush1.msra.mxu0 0.0
      %424 = vmatprep.subr.mxu0 0.0
      %425 = vmatpush1.msra.mxu0 0.0
      %426 = vmatprep.subr.mxu0 0.0
      %427 = vmatpush1.msra.mxu0 0.0
      %428 = vmatprep.subr.mxu0 0.0
      %429 = vmatpush1.msra.mxu0 0.0
      %430 = vmatprep.subr.mxu0 0.0
      %431 = vmatpush1.msra.mxu0 0.0
      %432 = vmatprep.subr.mxu0 0.0
      %433 = vmatpush1.msra.mxu0 0.0
      %434 = vmatprep.subr.mxu0 0.0
      %435 = vmatpush1.msra.mxu0 0.0
      %436 = vmatprep.subr.mxu0 0.0
      %437 = vmatpush1.msra.mxu0 0.0
      %438 = vmatprep.subr.mxu0 0.0
      %439 = vmatpush1.msra.mxu0 0.0
      %440 = vmatprep.subr.mxu0 0.0
      %441 = vmatpush1.msra.mxu0 0.0
      %442 = vmatprep.subr.mxu0 0.0
      %443 = vmatpush1.msra.mxu0 0.0
      %444 = vmatprep.subr.mxu0 0.0
      %445 = vmatpush1.msra.mxu0 0.0
      %446 = vmatprep.subr.mxu0 0.0
      %447 = vmatpush1.msra.mxu0 0.0
      %448 = vmatprep.mubr.f32.mxu0 0.0
      %449 = vmatmul.mubr.f32.gmra.mrb[0].mxu0 %v382
      %v450 = vpop.f32.mrb[0].mxu0
      %v451 = vadd.f32 0.0, %v450
      %v452 = vpop.f32.mrb[0].mxu0
      %453 = vdwg.mxu0
      %v454 = vld [vmem:[%s2] sm:$0xff]
      %v456 = vsel %vm289, %v451, 0
      %458 = vmatprep.subr.mxu0 0.0
      %459 = vmatpush1.msra.mxu0 %v454
      %460 = vmatprep.subr.mxu0 0.0
      %461 = vmatpush1.msra.mxu0 0.0
      %462 = vmatprep.subr.mxu0 0.0
      %463 = vmatpush1.msra.mxu0 0.0
      %464 = vmatprep.subr.mxu0 0.0
      %465 = vmatpush1.msra.mxu0 0.0
      %466 = vmatprep.subr.mxu0 0.0
      %467 = vmatpush1.msra.mxu0 0.0
      %468 = vmatprep.subr.mxu0 0.0
      %469 = vmatpush1.msra.mxu0 0.0
      %470 = vmatprep.subr.mxu0 0.0
      %471 = vmatpush1.msra.mxu0 0.0
      %472 = vmatprep.subr.mxu0 0.0
      %473 = vmatpush1.msra.mxu0 0.0
      %474 = vmatprep.subr.mxu0 0.0
      %475 = vmatpush1.msra.mxu0 0.0
      %476 = vmatprep.subr.mxu0 0.0
      %477 = vmatpush1.msra.mxu0 0.0
      %478 = vmatprep.subr.mxu0 0.0
      %479 = vmatpush1.msra.mxu0 0.0
      %480 = vmatprep.subr.mxu0 0.0
      %481 = vmatpush1.msra.mxu0 0.0
      %482 = vmatprep.subr.mxu0 0.0
      %483 = vmatpush1.msra.mxu0 0.0
      %484 = vmatprep.subr.mxu0 0.0
      %485 = vmatpush1.msra.mxu0 0.0
      %486 = vmatprep.subr.mxu0 0.0
      %487 = vmatpush1.msra.mxu0 0.0
      %488 = vmatprep.subr.mxu0 0.0
      %489 = vmatpush1.msra.mxu0 0.0
      %490 = vmatprep.subr.mxu0 0.0
      %491 = vmatpush1.msra.mxu0 0.0
      %492 = vmatprep.subr.mxu0 0.0
      %493 = vmatpush1.msra.mxu0 0.0
      %494 = vmatprep.subr.mxu0 0.0
      %495 = vmatpush1.msra.mxu0 0.0
      %496 = vmatprep.subr.mxu0 0.0
      %497 = vmatpush1.msra.mxu0 0.0
      %498 = vmatprep.subr.mxu0 0.0
      %499 = vmatpush1.msra.mxu0 0.0
      %500 = vmatprep.subr.mxu0 0.0
      %501 = vmatpush1.msra.mxu0 0.0
      %502 = vmatprep.subr.mxu0 0.0
      %503 = vmatpush1.msra.mxu0 0.0
      %504 = vmatprep.subr.mxu0 0.0
      %505 = vmatpush1.msra.mxu0 0.0
      %506 = vmatprep.subr.mxu0 0.0
      %507 = vmatpush1.msra.mxu0 0.0
      %508 = vmatprep.subr.mxu0 0.0
      %509 = vmatpush1.msra.mxu0 0.0
      %510 = vmatprep.subr.mxu0 0.0
      %511 = vmatpush1.msra.mxu0 0.0
      %512 = vmatprep.subr.mxu0 0.0
      %513 = vmatpush1.msra.mxu0 0.0
      %514 = vmatprep.subr.mxu0 0.0
      %515 = vmatpush1.msra.mxu0 0.0
      %516 = vmatprep.subr.mxu0 0.0
      %517 = vmatpush1.msra.mxu0 0.0
      %518 = vmatprep.subr.mxu0 0.0
      %519 = vmatpush1.msra.mxu0 0.0
      %520 = vmatprep.subr.mxu0 0.0
      %521 = vmatpush1.msra.mxu0 0.0
      %522 = vmatprep.mubr.f32.mxu0 0.0
      %523 = vmatmul.mubr.f32.gmra.mrb[0].mxu0 %v456
      %v524 = vpop.f32.mrb[0].mxu0
      %v525 = vadd.f32 0.0, %v524
      %v526 = vpop.f32.mrb[0].mxu0
      %527 = vdwg.mxu0
      %v528 = vadd.f32 %v280, %v525
      %529 = vrot.lane.b32.xlu0 %v282, 120
      %v530 = vpop.permute.xlu0 %529
      %531 = vrot.lane.b32.xlu0 %v281, 88
      %v532 = vpop.permute.xlu0 %531
      %v533 = vsel %vm289, %v530, 0
      %v535 = vsel %vm289, %v532, 0
      %537 = vmatprep.subr.mxu0 0.0
      %538 = vmatpush1.xpose.msra.mxu0 %v535
      %539 = vmatprep.subr.mxu0 0.0
      %540 = vmatpush1.xpose.msra.mxu0 0.0
      %541 = vmatprep.subr.mxu0 0.0
      %542 = vmatpush1.xpose.msra.mxu0 0.0
      %543 = vmatprep.subr.mxu0 0.0
      %544 = vmatpush1.xpose.msra.mxu0 0.0
      %545 = vmatprep.subr.mxu0 0.0
      %546 = vmatpush1.xpose.msra.mxu0 0.0
      %547 = vmatprep.subr.mxu0 0.0
      %548 = vmatpush1.xpose.msra.mxu0 0.0
      %549 = vmatprep.subr.mxu0 0.0
      %550 = vmatpush1.xpose.msra.mxu0 0.0
      %551 = vmatprep.subr.mxu0 0.0
      %552 = vmatpush1.xpose.msra.mxu0 0.0
      %553 = vmatprep.subr.mxu0 0.0
      %554 = vmatpush1.xpose.msra.mxu0 0.0
      %555 = vmatprep.subr.mxu0 0.0
      %556 = vmatpush1.xpose.msra.mxu0 0.0
      %557 = vmatprep.subr.mxu0 0.0
      %558 = vmatpush1.xpose.msra.mxu0 0.0
      %559 = vmatprep.subr.mxu0 0.0
      %560 = vmatpush1.xpose.msra.mxu0 0.0
      %561 = vmatprep.subr.mxu0 0.0
      %562 = vmatpush1.xpose.msra.mxu0 0.0
      %563 = vmatprep.subr.mxu0 0.0
      %564 = vmatpush1.xpose.msra.mxu0 0.0
      %565 = vmatprep.subr.mxu0 0.0
      %566 = vmatpush1.xpose.msra.mxu0 0.0
      %567 = vmatprep.subr.mxu0 0.0
      %568 = vmatpush1.xpose.msra.mxu0 0.0
      %569 = vmatprep.subr.mxu0 0.0
      %570 = vmatpush1.xpose.msra.mxu0 0.0
      %571 = vmatprep.subr.mxu0 0.0
      %572 = vmatpush1.xpose.msra.mxu0 0.0
      %573 = vmatprep.subr.mxu0 0.0
      %574 = vmatpush1.xpose.msra.mxu0 0.0
      %575 = vmatprep.subr.mxu0 0.0
      %576 = vmatpush1.xpose.msra.mxu0 0.0
      %577 = vmatprep.subr.mxu0 0.0
      %578 = vmatpush1.xpose.msra.mxu0 0.0
      %579 = vmatprep.subr.mxu0 0.0
      %580 = vmatpush1.xpose.msra.mxu0 0.0
      %581 = vmatprep.subr.mxu0 0.0
      %582 = vmatpush1.xpose.msra.mxu0 0.0
      %583 = vmatprep.subr.mxu0 0.0
      %584 = vmatpush1.xpose.msra.mxu0 0.0
      %585 = vmatprep.subr.mxu0 0.0
      %586 = vmatpush1.xpose.msra.mxu0 0.0
      %587 = vmatprep.subr.mxu0 0.0
      %588 = vmatpush1.xpose.msra.mxu0 0.0
      %589 = vmatprep.subr.mxu0 0.0
      %590 = vmatpush1.xpose.msra.mxu0 0.0
      %591 = vmatprep.subr.mxu0 0.0
      %592 = vmatpush1.xpose.msra.mxu0 0.0
      %593 = vmatprep.subr.mxu0 0.0
      %594 = vmatpush1.xpose.msra.mxu0 0.0
      %595 = vmatprep.subr.mxu0 0.0
      %596 = vmatpush1.xpose.msra.mxu0 0.0
      %597 = vmatprep.subr.mxu0 0.0
      %598 = vmatpush1.xpose.msra.mxu0 0.0
      %599 = vmatprep.subr.mxu0 0.0
      %600 = vmatpush1.xpose.msra.mxu0 0.0
      %601 = vmatprep.mubr.f32.mxu0 0.0
      %602 = vmatmul.mubr.f32.gmra.mrb[0].mxu0 %v533
      %v603 = vpop.f32.mrb[0].mxu0
      %v604 = vadd.f32 0.0, %v603
      %v605 = vpop.f32.mrb[0].mxu0
      %606 = vdwg.mxu0
      %v607 = vsel %vm270, %v604, -1e+30
      %v608 = vsel %vm289, %v607, -inf
      %609 = vmax.xlane.f32.xlu0 %v608
      %v610 = vpop.xlane.xlu0 %609
      %v611 = vsub.f32 %v607, %v610
      %v612 = vmul.f32 %v611, 1.442695
      %v613 = vpow.pop %v612
      %v614 = vsel %vm289, %v613, 0.0
      %615 = vadd.xlane.f32.xlu0 %v614
      %v616 = vpop.xlane.xlu0 %615
      %v617 = vrcp.pop %v616
      %v618 = vmul.f32 %v613, %v617
      %619 = vrot.lane.b32.xlu0 %v285, 56
      %v620 = vpop.permute.xlu0 %619
      %v623 = vsel %vm289, %v618, 0
      %625 = vmatprep.subr.mxu0 0.0
      %626 = vmatpush1.msra.mxu0 %v620
      %627 = vmatprep.subr.mxu0 0.0
      %628 = vmatpush1.msra.mxu0 0.0
      %629 = vmatprep.subr.mxu0 0.0
      %630 = vmatpush1.msra.mxu0 0.0
      %631 = vmatprep.subr.mxu0 0.0
      %632 = vmatpush1.msra.mxu0 0.0
      %633 = vmatprep.subr.mxu0 0.0
      %634 = vmatpush1.msra.mxu0 0.0
      %635 = vmatprep.subr.mxu0 0.0
      %636 = vmatpush1.msra.mxu0 0.0
      %637 = vmatprep.subr.mxu0 0.0
      %638 = vmatpush1.msra.mxu0 0.0
      %639 = vmatprep.subr.mxu0 0.0
      %640 = vmatpush1.msra.mxu0 0.0
      %641 = vmatprep.subr.mxu0 0.0
      %642 = vmatpush1.msra.mxu0 0.0
      %643 = vmatprep.subr.mxu0 0.0
      %644 = vmatpush1.msra.mxu0 0.0
      %645 = vmatprep.subr.mxu0 0.0
      %646 = vmatpush1.msra.mxu0 0.0
      %647 = vmatprep.subr.mxu0 0.0
      %648 = vmatpush1.msra.mxu0 0.0
      %649 = vmatprep.subr.mxu0 0.0
      %650 = vmatpush1.msra.mxu0 0.0
      %651 = vmatprep.subr.mxu0 0.0
      %652 = vmatpush1.msra.mxu0 0.0
      %653 = vmatprep.subr.mxu0 0.0
      %654 = vmatpush1.msra.mxu0 0.0
      %655 = vmatprep.subr.mxu0 0.0
      %656 = vmatpush1.msra.mxu0 0.0
      %657 = vmatprep.subr.mxu0 0.0
      %658 = vmatpush1.msra.mxu0 0.0
      %659 = vmatprep.subr.mxu0 0.0
      %660 = vmatpush1.msra.mxu0 0.0
      %661 = vmatprep.subr.mxu0 0.0
      %662 = vmatpush1.msra.mxu0 0.0
      %663 = vmatprep.subr.mxu0 0.0
      %664 = vmatpush1.msra.mxu0 0.0
      %665 = vmatprep.subr.mxu0 0.0
      %666 = vmatpush1.msra.mxu0 0.0
      %667 = vmatprep.subr.mxu0 0.0
      %668 = vmatpush1.msra.mxu0 0.0
      %669 = vmatprep.subr.mxu0 0.0
      %670 = vmatpush1.msra.mxu0 0.0
      %671 = vmatprep.subr.mxu0 0.0
      %672 = vmatpush1.msra.mxu0 0.0
      %673 = vmatprep.subr.mxu0 0.0
      %674 = vmatpush1.msra.mxu0 0.0
      %675 = vmatprep.subr.mxu0 0.0
      %676 = vmatpush1.msra.mxu0 0.0
      %677 = vmatprep.subr.mxu0 0.0
      %678 = vmatpush1.msra.mxu0 0.0
      %679 = vmatprep.subr.mxu0 0.0
      %680 = vmatpush1.msra.mxu0 0.0
      %681 = vmatprep.subr.mxu0 0.0
      %682 = vmatpush1.msra.mxu0 0.0
      %683 = vmatprep.subr.mxu0 0.0
      %684 = vmatpush1.msra.mxu0 0.0
      %685 = vmatprep.subr.mxu0 0.0
      %686 = vmatpush1.msra.mxu0 0.0
      %687 = vmatprep.subr.mxu0 0.0
      %688 = vmatpush1.msra.mxu0 0.0
      %689 = vmatprep.mubr.f32.mxu0 0.0
      %690 = vmatmul.mubr.f32.gmra.mrb[0].mxu0 %v623
      %v691 = vpop.f32.mrb[0].mxu0
      %v692 = vadd.f32 0.0, %v691
      %v693 = vpop.f32.mrb[0].mxu0
      %694 = vdwg.mxu0
      %v695 = vld [vmem:[%s2 + $0x8] sm:$0xff]
      %v697 = vsel %vm289, %v692, 0
      %699 = vmatprep.subr.mxu0 0.0
      %700 = vmatpush1.msra.mxu0 %v695
      %701 = vmatprep.subr.mxu0 0.0
      %702 = vmatpush1.msra.mxu0 0.0
      %703 = vmatprep.subr.mxu0 0.0
      %704 = vmatpush1.msra.mxu0 0.0
      %705 = vmatprep.subr.mxu0 0.0
      %706 = vmatpush1.msra.mxu0 0.0
      %707 = vmatprep.subr.mxu0 0.0
      %708 = vmatpush1.msra.mxu0 0.0
      %709 = vmatprep.subr.mxu0 0.0
      %710 = vmatpush1.msra.mxu0 0.0
      %711 = vmatprep.subr.mxu0 0.0
      %712 = vmatpush1.msra.mxu0 0.0
      %713 = vmatprep.subr.mxu0 0.0
      %714 = vmatpush1.msra.mxu0 0.0
      %715 = vmatprep.subr.mxu0 0.0
      %716 = vmatpush1.msra.mxu0 0.0
      %717 = vmatprep.subr.mxu0 0.0
      %718 = vmatpush1.msra.mxu0 0.0
      %719 = vmatprep.subr.mxu0 0.0
      %720 = vmatpush1.msra.mxu0 0.0
      %721 = vmatprep.subr.mxu0 0.0
      %722 = vmatpush1.msra.mxu0 0.0
      %723 = vmatprep.subr.mxu0 0.0
      %724 = vmatpush1.msra.mxu0 0.0
      %725 = vmatprep.subr.mxu0 0.0
      %726 = vmatpush1.msra.mxu0 0.0
      %727 = vmatprep.subr.mxu0 0.0
      %728 = vmatpush1.msra.mxu0 0.0
      %729 = vmatprep.subr.mxu0 0.0
      %730 = vmatpush1.msra.mxu0 0.0
      %731 = vmatprep.subr.mxu0 0.0
      %732 = vmatpush1.msra.mxu0 0.0
      %733 = vmatprep.subr.mxu0 0.0
      %734 = vmatpush1.msra.mxu0 0.0
      %735 = vmatprep.subr.mxu0 0.0
      %736 = vmatpush1.msra.mxu0 0.0
      %737 = vmatprep.subr.mxu0 0.0
      %738 = vmatpush1.msra.mxu0 0.0
      %739 = vmatprep.subr.mxu0 0.0
      %740 = vmatpush1.msra.mxu0 0.0
      %741 = vmatprep.subr.mxu0 0.0
      %742 = vmatpush1.msra.mxu0 0.0
      %743 = vmatprep.subr.mxu0 0.0
      %744 = vmatpush1.msra.mxu0 0.0
      %745 = vmatprep.subr.mxu0 0.0
      %746 = vmatpush1.msra.mxu0 0.0
      %747 = vmatprep.subr.mxu0 0.0
      %748 = vmatpush1.msra.mxu0 0.0
      %749 = vmatprep.subr.mxu0 0.0
      %750 = vmatpush1.msra.mxu0 0.0
      %751 = vmatprep.subr.mxu0 0.0
      %752 = vmatpush1.msra.mxu0 0.0
      %753 = vmatprep.subr.mxu0 0.0
      %754 = vmatpush1.msra.mxu0 0.0
      %755 = vmatprep.subr.mxu0 0.0
      %756 = vmatpush1.msra.mxu0 0.0
      %757 = vmatprep.subr.mxu0 0.0
      %758 = vmatpush1.msra.mxu0 0.0
      %759 = vmatprep.subr.mxu0 0.0
      %760 = vmatpush1.msra.mxu0 0.0
      %761 = vmatprep.subr.mxu0 0.0
      %762 = vmatpush1.msra.mxu0 0.0
      %763 = vmatprep.mubr.f32.mxu0 0.0
      %764 = vmatmul.mubr.f32.gmra.mrb[0].mxu0 %v697
      %v765 = vpop.f32.mrb[0].mxu0
      %v766 = vadd.f32 0.0, %v765
      %v767 = vpop.f32.mrb[0].mxu0
      %768 = vdwg.mxu0
      %v769 = vadd.f32 %v528, %v766
      %770 = vrot.lane.b32.xlu0 %v282, 112
      %v771 = vpop.permute.xlu0 %770
      %772 = vrot.lane.b32.xlu0 %v281, 80
      %v773 = vpop.permute.xlu0 %772
      %v774 = vsel %vm289, %v771, 0
      %v776 = vsel %vm289, %v773, 0
      %778 = vmatprep.subr.mxu0 0.0
      %779 = vmatpush1.xpose.msra.mxu0 %v776
      %780 = vmatprep.subr.mxu0 0.0
      %781 = vmatpush1.xpose.msra.mxu0 0.0
      %782 = vmatprep.subr.mxu0 0.0
      %783 = vmatpush1.xpose.msra.mxu0 0.0
      %784 = vmatprep.subr.mxu0 0.0
      %785 = vmatpush1.xpose.msra.mxu0 0.0
      %786 = vmatprep.subr.mxu0 0.0
      %787 = vmatpush1.xpose.msra.mxu0 0.0
      %788 = vmatprep.subr.mxu0 0.0
      %789 = vmatpush1.xpose.msra.mxu0 0.0
      %790 = vmatprep.subr.mxu0 0.0
      %791 = vmatpush1.xpose.msra.mxu0 0.0
      %792 = vmatprep.subr.mxu0 0.0
      %793 = vmatpush1.xpose.msra.mxu0 0.0
      %794 = vmatprep.subr.mxu0 0.0
      %795 = vmatpush1.xpose.msra.mxu0 0.0
      %796 = vmatprep.subr.mxu0 0.0
      %797 = vmatpush1.xpose.msra.mxu0 0.0
      %798 = vmatprep.subr.mxu0 0.0
      %799 = vmatpush1.xpose.msra.mxu0 0.0
      %800 = vmatprep.subr.mxu0 0.0
      %801 = vmatpush1.xpose.msra.mxu0 0.0
      %802 = vmatprep.subr.mxu0 0.0
      %803 = vmatpush1.xpose.msra.mxu0 0.0
      %804 = vmatprep.subr.mxu0 0.0
      %805 = vmatpush1.xpose.msra.mxu0 0.0
      %806 = vmatprep.subr.mxu0 0.0
      %807 = vmatpush1.xpose.msra.mxu0 0.0
      %808 = vmatprep.subr.mxu0 0.0
      %809 = vmatpush1.xpose.msra.mxu0 0.0
      %810 = vmatprep.subr.mxu0 0.0
      %811 = vmatpush1.xpose.msra.mxu0 0.0
      %812 = vmatprep.subr.mxu0 0.0
      %813 = vmatpush1.xpose.msra.mxu0 0.0
      %814 = vmatprep.subr.mxu0 0.0
      %815 = vmatpush1.xpose.msra.mxu0 0.0
      %816 = vmatprep.subr.mxu0 0.0
      %817 = vmatpush1.xpose.msra.mxu0 0.0
      %818 = vmatprep.subr.mxu0 0.0
      %819 = vmatpush1.xpose.msra.mxu0 0.0
      %820 = vmatprep.subr.mxu0 0.0
      %821 = vmatpush1.xpose.msra.mxu0 0.0
      %822 = vmatprep.subr.mxu0 0.0
      %823 = vmatpush1.xpose.msra.mxu0 0.0
      %824 = vmatprep.subr.mxu0 0.0
      %825 = vmatpush1.xpose.msra.mxu0 0.0
      %826 = vmatprep.subr.mxu0 0.0
      %827 = vmatpush1.xpose.msra.mxu0 0.0
      %828 = vmatprep.subr.mxu0 0.0
      %829 = vmatpush1.xpose.msra.mxu0 0.0
      %830 = vmatprep.subr.mxu0 0.0
      %831 = vmatpush1.xpose.msra.mxu0 0.0
      %832 = vmatprep.subr.mxu0 0.0
      %833 = vmatpush1.xpose.msra.mxu0 0.0
      %834 = vmatprep.subr.mxu0 0.0
      %835 = vmatpush1.xpose.msra.mxu0 0.0
      %836 = vmatprep.subr.mxu0 0.0
      %837 = vmatpush1.xpose.msra.mxu0 0.0
      %838 = vmatprep.subr.mxu0 0.0
      %839 = vmatpush1.xpose.msra.mxu0 0.0
      %840 = vmatprep.subr.mxu0 0.0
      %841 = vmatpush1.xpose.msra.mxu0 0.0
      %842 = vmatprep.mubr.f32.mxu0 0.0
      %843 = vmatmul.mubr.f32.gmra.mrb[0].mxu0 %v774
      %v844 = vpop.f32.mrb[0].mxu0
      %v845 = vadd.f32 0.0, %v844
      %v846 = vpop.f32.mrb[0].mxu0
      %847 = vdwg.mxu0
      %v848 = vsel %vm270, %v845, -1e+30
      %v849 = vsel %vm289, %v848, -inf
      %850 = vmax.xlane.f32.xlu0 %v849
      %v851 = vpop.xlane.xlu0 %850
      %v852 = vsub.f32 %v848, %v851
      %v853 = vmul.f32 %v852, 1.442695
      %v854 = vpow.pop %v853
      %v855 = vsel %vm289, %v854, 0.0
      %856 = vadd.xlane.f32.xlu0 %v855
      %v857 = vpop.xlane.xlu0 %856
      %v858 = vrcp.pop %v857
      %v859 = vmul.f32 %v854, %v858
      %860 = vrot.lane.b32.xlu0 %v285, 48
      %v861 = vpop.permute.xlu0 %860
      %v864 = vsel %vm289, %v859, 0
      %866 = vmatprep.subr.mxu0 0.0
      %867 = vmatpush1.msra.mxu0 %v861
      %868 = vmatprep.subr.mxu0 0.0
      %869 = vmatpush1.msra.mxu0 0.0
      %870 = vmatprep.subr.mxu0 0.0
      %871 = vmatpush1.msra.mxu0 0.0
      %872 = vmatprep.subr.mxu0 0.0
      %873 = vmatpush1.msra.mxu0 0.0
      %874 = vmatprep.subr.mxu0 0.0
      %875 = vmatpush1.msra.mxu0 0.0
      %876 = vmatprep.subr.mxu0 0.0
      %877 = vmatpush1.msra.mxu0 0.0
      %878 = vmatprep.subr.mxu0 0.0
      %879 = vmatpush1.msra.mxu0 0.0
      %880 = vmatprep.subr.mxu0 0.0
      %881 = vmatpush1.msra.mxu0 0.0
      %882 = vmatprep.subr.mxu0 0.0
      %883 = vmatpush1.msra.mxu0 0.0
      %884 = vmatprep.subr.mxu0 0.0
      %885 = vmatpush1.msra.mxu0 0.0
      %886 = vmatprep.subr.mxu0 0.0
      %887 = vmatpush1.msra.mxu0 0.0
      %888 = vmatprep.subr.mxu0 0.0
      %889 = vmatpush1.msra.mxu0 0.0
      %890 = vmatprep.subr.mxu0 0.0
      %891 = vmatpush1.msra.mxu0 0.0
      %892 = vmatprep.subr.mxu0 0.0
      %893 = vmatpush1.msra.mxu0 0.0
      %894 = vmatprep.subr.mxu0 0.0
      %895 = vmatpush1.msra.mxu0 0.0
      %896 = vmatprep.subr.mxu0 0.0
      %897 = vmatpush1.msra.mxu0 0.0
      %898 = vmatprep.subr.mxu0 0.0
      %899 = vmatpush1.msra.mxu0 0.0
      %900 = vmatprep.subr.mxu0 0.0
      %901 = vmatpush1.msra.mxu0 0.0
      %902 = vmatprep.subr.mxu0 0.0
      %903 = vmatpush1.msra.mxu0 0.0
      %904 = vmatprep.subr.mxu0 0.0
      %905 = vmatpush1.msra.mxu0 0.0
      %906 = vmatprep.subr.mxu0 0.0
      %907 = vmatpush1.msra.mxu0 0.0
      %908 = vmatprep.subr.mxu0 0.0
      %909 = vmatpush1.msra.mxu0 0.0
      %910 = vmatprep.subr.mxu0 0.0
      %911 = vmatpush1.msra.mxu0 0.0
      %912 = vmatprep.subr.mxu0 0.0
      %913 = vmatpush1.msra.mxu0 0.0
      %914 = vmatprep.subr.mxu0 0.0
      %915 = vmatpush1.msra.mxu0 0.0
      %916 = vmatprep.subr.mxu0 0.0
      %917 = vmatpush1.msra.mxu0 0.0
      %918 = vmatprep.subr.mxu0 0.0
      %919 = vmatpush1.msra.mxu0 0.0
      %920 = vmatprep.subr.mxu0 0.0
      %921 = vmatpush1.msra.mxu0 0.0
      %922 = vmatprep.subr.mxu0 0.0
      %923 = vmatpush1.msra.mxu0 0.0
      %924 = vmatprep.subr.mxu0 0.0
      %925 = vmatpush1.msra.mxu0 0.0
      %926 = vmatprep.subr.mxu0 0.0
      %927 = vmatpush1.msra.mxu0 0.0
      %928 = vmatprep.subr.mxu0 0.0
      %929 = vmatpush1.msra.mxu0 0.0
      %930 = vmatprep.mubr.f32.mxu0 0.0
      %931 = vmatmul.mubr.f32.gmra.mrb[0].mxu0 %v864
      %v932 = vpop.f32.mrb[0].mxu0
      %v933 = vadd.f32 0.0, %v932
      %v934 = vpop.f32.mrb[0].mxu0
      %935 = vdwg.mxu0
      %v936 = vld [vmem:[%s2 + $0x10] sm:$0xff]
      %v938 = vsel %vm289, %v933, 0
      %940 = vmatprep.subr.mxu0 0.0
      %941 = vmatpush1.msra.mxu0 %v936
      %942 = vmatprep.subr.mxu0 0.0
      %943 = vmatpush1.msra.mxu0 0.0
      %944 = vmatprep.subr.mxu0 0.0
      %945 = vmatpush1.msra.mxu0 0.0
      %946 = vmatprep.subr.mxu0 0.0
      %947 = vmatpush1.msra.mxu0 0.0
      %948 = vmatprep.subr.mxu0 0.0
      %949 = vmatpush1.msra.mxu0 0.0
      %950 = vmatprep.subr.mxu0 0.0
      %951 = vmatpush1.msra.mxu0 0.0
      %952 = vmatprep.subr.mxu0 0.0
      %953 = vmatpush1.msra.mxu0 0.0
      %954 = vmatprep.subr.mxu0 0.0
      %955 = vmatpush1.msra.mxu0 0.0
      %956 = vmatprep.subr.mxu0 0.0
      %957 = vmatpush1.msra.mxu0 0.0
      %958 = vmatprep.subr.mxu0 0.0
      %959 = vmatpush1.msra.mxu0 0.0
      %960 = vmatprep.subr.mxu0 0.0
      %961 = vmatpush1.msra.mxu0 0.0
      %962 = vmatprep.subr.mxu0 0.0
      %963 = vmatpush1.msra.mxu0 0.0
      %964 = vmatprep.subr.mxu0 0.0
      %965 = vmatpush1.msra.mxu0 0.0
      %966 = vmatprep.subr.mxu0 0.0
      %967 = vmatpush1.msra.mxu0 0.0
      %968 = vmatprep.subr.mxu0 0.0
      %969 = vmatpush1.msra.mxu0 0.0
      %970 = vmatprep.subr.mxu0 0.0
      %971 = vmatpush1.msra.mxu0 0.0
      %972 = vmatprep.subr.mxu0 0.0
      %973 = vmatpush1.msra.mxu0 0.0
      %974 = vmatprep.subr.mxu0 0.0
      %975 = vmatpush1.msra.mxu0 0.0
      %976 = vmatprep.subr.mxu0 0.0
      %977 = vmatpush1.msra.mxu0 0.0
      %978 = vmatprep.subr.mxu0 0.0
      %979 = vmatpush1.msra.mxu0 0.0
      %980 = vmatprep.subr.mxu0 0.0
      %981 = vmatpush1.msra.mxu0 0.0
      %982 = vmatprep.subr.mxu0 0.0
      %983 = vmatpush1.msra.mxu0 0.0
      %984 = vmatprep.subr.mxu0 0.0
      %985 = vmatpush1.msra.mxu0 0.0
      %986 = vmatprep.subr.mxu0 0.0
      %987 = vmatpush1.msra.mxu0 0.0
      %988 = vmatprep.subr.mxu0 0.0
      %989 = vmatpush1.msra.mxu0 0.0
      %990 = vmatprep.subr.mxu0 0.0
      %991 = vmatpush1.msra.mxu0 0.0
      %992 = vmatprep.subr.mxu0 0.0
      %993 = vmatpush1.msra.mxu0 0.0
      %994 = vmatprep.subr.mxu0 0.0
      %995 = vmatpush1.msra.mxu0 0.0
      %996 = vmatprep.subr.mxu0 0.0
      %997 = vmatpush1.msra.mxu0 0.0
      %998 = vmatprep.subr.mxu0 0.0
      %999 = vmatpush1.msra.mxu0 0.0
      %1000 = vmatprep.subr.mxu0 0.0
      %1001 = vmatpush1.msra.mxu0 0.0
      %1002 = vmatprep.subr.mxu0 0.0
      %1003 = vmatpush1.msra.mxu0 0.0
      %1004 = vmatprep.mubr.f32.mxu0 0.0
      %1005 = vmatmul.mubr.f32.gmra.mrb[0].mxu0 %v938
      %v1006 = vpop.f32.mrb[0].mxu0
      %v1007 = vadd.f32 0.0, %v1006
      %v1008 = vpop.f32.mrb[0].mxu0
      %1009 = vdwg.mxu0
      %v1010 = vadd.f32 %v769, %v1007
      %1011 = vrot.lane.b32.xlu0 %v282, 104
      %v1012 = vpop.permute.xlu0 %1011
      %1013 = vrot.lane.b32.xlu0 %v281, 72
      %v1014 = vpop.permute.xlu0 %1013
      %v1015 = vsel %vm289, %v1012, 0
      %v1017 = vsel %vm289, %v1014, 0
      %1019 = vmatprep.subr.mxu0 0.0
      %1020 = vmatpush1.xpose.msra.mxu0 %v1017
      %1021 = vmatprep.subr.mxu0 0.0
      %1022 = vmatpush1.xpose.msra.mxu0 0.0
      %1023 = vmatprep.subr.mxu0 0.0
      %1024 = vmatpush1.xpose.msra.mxu0 0.0
      %1025 = vmatprep.subr.mxu0 0.0
      %1026 = vmatpush1.xpose.msra.mxu0 0.0
      %1027 = vmatprep.subr.mxu0 0.0
      %1028 = vmatpush1.xpose.msra.mxu0 0.0
      %1029 = vmatprep.subr.mxu0 0.0
      %1030 = vmatpush1.xpose.msra.mxu0 0.0
      %1031 = vmatprep.subr.mxu0 0.0
      %1032 = vmatpush1.xpose.msra.mxu0 0.0
      %1033 = vmatprep.subr.mxu0 0.0
      %1034 = vmatpush1.xpose.msra.mxu0 0.0
      %1035 = vmatprep.subr.mxu0 0.0
      %1036 = vmatpush1.xpose.msra.mxu0 0.0
      %1037 = vmatprep.subr.mxu0 0.0
      %1038 = vmatpush1.xpose.msra.mxu0 0.0
      %1039 = vmatprep.subr.mxu0 0.0
      %1040 = vmatpush1.xpose.msra.mxu0 0.0
      %1041 = vmatprep.subr.mxu0 0.0
      %1042 = vmatpush1.xpose.msra.mxu0 0.0
      %1043 = vmatprep.subr.mxu0 0.0
      %1044 = vmatpush1.xpose.msra.mxu0 0.0
      %1045 = vmatprep.subr.mxu0 0.0
      %1046 = vmatpush1.xpose.msra.mxu0 0.0
      %1047 = vmatprep.subr.mxu0 0.0
      %1048 = vmatpush1.xpose.msra.mxu0 0.0
      %1049 = vmatprep.subr.mxu0 0.0
      %1050 = vmatpush1.xpose.msra.mxu0 0.0
      %1051 = vmatprep.subr.mxu0 0.0
      %1052 = vmatpush1.xpose.msra.mxu0 0.0
      %1053 = vmatprep.subr.mxu0 0.0
      %1054 = vmatpush1.xpose.msra.mxu0 0.0
      %1055 = vmatprep.subr.mxu0 0.0
      %1056 = vmatpush1.xpose.msra.mxu0 0.0
      %1057 = vmatprep.subr.mxu0 0.0
      %1058 = vmatpush1.xpose.msra.mxu0 0.0
      %1059 = vmatprep.subr.mxu0 0.0
      %1060 = vmatpush1.xpose.msra.mxu0 0.0
      %1061 = vmatprep.subr.mxu0 0.0
      %1062 = vmatpush1.xpose.msra.mxu0 0.0
      %1063 = vmatprep.subr.mxu0 0.0
      %1064 = vmatpush1.xpose.msra.mxu0 0.0
      %1065 = vmatprep.subr.mxu0 0.0
      %1066 = vmatpush1.xpose.msra.mxu0 0.0
      %1067 = vmatprep.subr.mxu0 0.0
      %1068 = vmatpush1.xpose.msra.mxu0 0.0
      %1069 = vmatprep.subr.mxu0 0.0
      %1070 = vmatpush1.xpose.msra.mxu0 0.0
      %1071 = vmatprep.subr.mxu0 0.0
      %1072 = vmatpush1.xpose.msra.mxu0 0.0
      %1073 = vmatprep.subr.mxu0 0.0
      %1074 = vmatpush1.xpose.msra.mxu0 0.0
      %1075 = vmatprep.subr.mxu0 0.0
      %1076 = vmatpush1.xpose.msra.mxu0 0.0
      %1077 = vmatprep.subr.mxu0 0.0
      %1078 = vmatpush1.xpose.msra.mxu0 0.0
      %1079 = vmatprep.subr.mxu0 0.0
      %1080 = vmatpush1.xpose.msra.mxu0 0.0
      %1081 = vmatprep.subr.mxu0 0.0
      %1082 = vmatpush1.xpose.msra.mxu0 0.0
      %1083 = vmatprep.mubr.f32.mxu0 0.0
      %1084 = vmatmul.mubr.f32.gmra.mrb[0].mxu0 %v1015
      %v1085 = vpop.f32.mrb[0].mxu0
      %v1086 = vadd.f32 0.0, %v1085
      %v1087 = vpop.f32.mrb[0].mxu0
      %1088 = vdwg.mxu0
      %v1089 = vsel %vm270, %v1086, -1e+30
      %v1090 = vsel %vm289, %v1089, -inf
      %1091 = vmax.xlane.f32.xlu0 %v1090
      %v1092 = vpop.xlane.xlu0 %1091
      %v1093 = vsub.f32 %v1089, %v1092
      %v1094 = vmul.f32 %v1093, 1.442695
      %v1095 = vpow.pop %v1094
      %v1096 = vsel %vm289, %v1095, 0.0
      %1097 = vadd.xlane.f32.xlu0 %v1096
      %v1098 = vpop.xlane.xlu0 %1097
      %v1099 = vrcp.pop %v1098
      %v1100 = vmul.f32 %v1095, %v1099
      %1101 = vrot.lane.b32.xlu0 %v285, 40
      %v1102 = vpop.permute.xlu0 %1101
      %v1105 = vsel %vm289, %v1100, 0
      %1107 = vmatprep.subr.mxu0 0.0
      %1108 = vmatpush1.msra.mxu0 %v1102
      %1109 = vmatprep.subr.mxu0 0.0
      %1110 = vmatpush1.msra.mxu0 0.0
      %1111 = vmatprep.subr.mxu0 0.0
      %1112 = vmatpush1.msra.mxu0 0.0
      %1113 = vmatprep.subr.mxu0 0.0
      %1114 = vmatpush1.msra.mxu0 0.0
      %1115 = vmatprep.subr.mxu0 0.0
      %1116 = vmatpush1.msra.mxu0 0.0
      %1117 = vmatprep.subr.mxu0 0.0
      %1118 = vmatpush1.msra.mxu0 0.0
      %1119 = vmatprep.subr.mxu0 0.0
      %1120 = vmatpush1.msra.mxu0 0.0
      %1121 = vmatprep.subr.mxu0 0.0
      %1122 = vmatpush1.msra.mxu0 0.0
      %1123 = vmatprep.subr.mxu0 0.0
      %1124 = vmatpush1.msra.mxu0 0.0
      %1125 = vmatprep.subr.mxu0 0.0
      %1126 = vmatpush1.msra.mxu0 0.0
      %1127 = vmatprep.subr.mxu0 0.0
      %1128 = vmatpush1.msra.mxu0 0.0
      %1129 = vmatprep.subr.mxu0 0.0
      %1130 = vmatpush1.msra.mxu0 0.0
      %1131 = vmatprep.subr.mxu0 0.0
      %1132 = vmatpush1.msra.mxu0 0.0
      %1133 = vmatprep.subr.mxu0 0.0
      %1134 = vmatpush1.msra.mxu0 0.0
      %1135 = vmatprep.subr.mxu0 0.0
      %1136 = vmatpush1.msra.mxu0 0.0
      %1137 = vmatprep.subr.mxu0 0.0
      %1138 = vmatpush1.msra.mxu0 0.0
      %1139 = vmatprep.subr.mxu0 0.0
      %1140 = vmatpush1.msra.mxu0 0.0
      %1141 = vmatprep.subr.mxu0 0.0
      %1142 = vmatpush1.msra.mxu0 0.0
      %1143 = vmatprep.subr.mxu0 0.0
      %1144 = vmatpush1.msra.mxu0 0.0
      %1145 = vmatprep.subr.mxu0 0.0
      %1146 = vmatpush1.msra.mxu0 0.0
      %1147 = vmatprep.subr.mxu0 0.0
      %1148 = vmatpush1.msra.mxu0 0.0
      %1149 = vmatprep.subr.mxu0 0.0
      %1150 = vmatpush1.msra.mxu0 0.0
      %1151 = vmatprep.subr.mxu0 0.0
      %1152 = vmatpush1.msra.mxu0 0.0
      %1153 = vmatprep.subr.mxu0 0.0
      %1154 = vmatpush1.msra.mxu0 0.0
      %1155 = vmatprep.subr.mxu0 0.0
      %1156 = vmatpush1.msra.mxu0 0.0
      %1157 = vmatprep.subr.mxu0 0.0
      %1158 = vmatpush1.msra.mxu0 0.0
      %1159 = vmatprep.subr.mxu0 0.0
      %1160 = vmatpush1.msra.mxu0 0.0
      %1161 = vmatprep.subr.mxu0 0.0
      %1162 = vmatpush1.msra.mxu0 0.0
      %1163 = vmatprep.subr.mxu0 0.0
      %1164 = vmatpush1.msra.mxu0 0.0
      %1165 = vmatprep.subr.mxu0 0.0
      %1166 = vmatpush1.msra.mxu0 0.0
      %1167 = vmatprep.subr.mxu0 0.0
      %1168 = vmatpush1.msra.mxu0 0.0
      %1169 = vmatprep.subr.mxu0 0.0
      %1170 = vmatpush1.msra.mxu0 0.0
      %1171 = vmatprep.mubr.f32.mxu0 0.0
      %1172 = vmatmul.mubr.f32.gmra.mrb[0].mxu0 %v1105
      %v1173 = vpop.f32.mrb[0].mxu0
      %v1174 = vadd.f32 0.0, %v1173
      %v1175 = vpop.f32.mrb[0].mxu0
      %1176 = vdwg.mxu0
      %v1177 = vld [vmem:[%s2 + $0x18] sm:$0xff]
      %v1179 = vsel %vm289, %v1174, 0
      %1181 = vmatprep.subr.mxu0 0.0
      %1182 = vmatpush1.msra.mxu0 %v1177
      %1183 = vmatprep.subr.mxu0 0.0
      %1184 = vmatpush1.msra.mxu0 0.0
      %1185 = vmatprep.subr.mxu0 0.0
      %1186 = vmatpush1.msra.mxu0 0.0
      %1187 = vmatprep.subr.mxu0 0.0
      %1188 = vmatpush1.msra.mxu0 0.0
      %1189 = vmatprep.subr.mxu0 0.0
      %1190 = vmatpush1.msra.mxu0 0.0
      %1191 = vmatprep.subr.mxu0 0.0
      %1192 = vmatpush1.msra.mxu0 0.0
      %1193 = vmatprep.subr.mxu0 0.0
      %1194 = vmatpush1.msra.mxu0 0.0
      %1195 = vmatprep.subr.mxu0 0.0
      %1196 = vmatpush1.msra.mxu0 0.0
      %1197 = vmatprep.subr.mxu0 0.0
      %1198 = vmatpush1.msra.mxu0 0.0
      %1199 = vmatprep.subr.mxu0 0.0
      %1200 = vmatpush1.msra.mxu0 0.0
      %1201 = vmatprep.subr.mxu0 0.0
      %1202 = vmatpush1.msra.mxu0 0.0
      %1203 = vmatprep.subr.mxu0 0.0
      %1204 = vmatpush1.msra.mxu0 0.0
      %1205 = vmatprep.subr.mxu0 0.0
      %1206 = vmatpush1.msra.mxu0 0.0
      %1207 = vmatprep.subr.mxu0 0.0
      %1208 = vmatpush1.msra.mxu0 0.0
      %1209 = vmatprep.subr.mxu0 0.0
      %1210 = vmatpush1.msra.mxu0 0.0
      %1211 = vmatprep.subr.mxu0 0.0
      %1212 = vmatpush1.msra.mxu0 0.0
      %1213 = vmatprep.subr.mxu0 0.0
      %1214 = vmatpush1.msra.mxu0 0.0
      %1215 = vmatprep.subr.mxu0 0.0
      %1216 = vmatpush1.msra.mxu0 0.0
      %1217 = vmatprep.subr.mxu0 0.0
      %1218 = vmatpush1.msra.mxu0 0.0
      %1219 = vmatprep.subr.mxu0 0.0
      %1220 = vmatpush1.msra.mxu0 0.0
      %1221 = vmatprep.subr.mxu0 0.0
      %1222 = vmatpush1.msra.mxu0 0.0
      %1223 = vmatprep.subr.mxu0 0.0
      %1224 = vmatpush1.msra.mxu0 0.0
      %1225 = vmatprep.subr.mxu0 0.0
      %1226 = vmatpush1.msra.mxu0 0.0
      %1227 = vmatprep.subr.mxu0 0.0
      %1228 = vmatpush1.msra.mxu0 0.0
      %1229 = vmatprep.subr.mxu0 0.0
      %1230 = vmatpush1.msra.mxu0 0.0
      %1231 = vmatprep.subr.mxu0 0.0
      %1232 = vmatpush1.msra.mxu0 0.0
      %1233 = vmatprep.subr.mxu0 0.0
      %1234 = vmatpush1.msra.mxu0 0.0
      %1235 = vmatprep.subr.mxu0 0.0
      %1236 = vmatpush1.msra.mxu0 0.0
      %1237 = vmatprep.subr.mxu0 0.0
      %1238 = vmatpush1.msra.mxu0 0.0
      %1239 = vmatprep.subr.mxu0 0.0
      %1240 = vmatpush1.msra.mxu0 0.0
      %1241 = vmatprep.subr.mxu0 0.0
      %1242 = vmatpush1.msra.mxu0 0.0
      %1243 = vmatprep.subr.mxu0 0.0
      %1244 = vmatpush1.msra.mxu0 0.0
      %1245 = vmatprep.mubr.f32.mxu0 0.0
      %1246 = vmatmul.mubr.f32.gmra.mrb[0].mxu0 %v1179
      %v1247 = vpop.f32.mrb[0].mxu0
      %v1248 = vadd.f32 0.0, %v1247
      %v1249 = vpop.f32.mrb[0].mxu0
      %1250 = vdwg.mxu0
      %v1251 = vadd.f32 %v1010, %v1248
      %vm1252 = vcmask 261120
      %1253 = vst.msk [vmem:[%s259] sm:$0xff] %vm1252, %v1251
      %p1254 = scmp.lt.s32.totalorder %s19, 1
      %s1255 = scalar_select %p1254, %s19, 1
      %p1256 = scmp.lt.s32.totalorder %s20, 1
      %s1257 = scalar_select %p1256, %s20, 1
      %s1258 = smul.addr %s1255, 2
      %s1259 = sadd.s32 %s1257, %s1258
      %s1260 = smul.addr %s1259, 8
      %s1261 = scalar_lea.vmem %s4, %s1260
      // Predicated region
      $region37: #{block_forward.5} parent=35 // pred_check
        %p1262 = pneg %p145
      $region38: #{block_forward.5} parent=35 // pred_check_branch
        %1264 = sbr.rel (%p1262) target = $region40
      $region39: #{block_forward.5} parent=35 // pred_region
        _
      $region40: #{block_forward.5} parent=35 // pred_fallthru
        _
    $region36: #{block_forward.5} parent=5 // pred_fallthru
      _
    %p1265 = scmp.le.s32.totalorder 2, %s10
    // Predicated region
    $region41: #{block_forward.5} parent=5 // pred_check
      %p1266 = pneg %p1265
    $region42: #{block_forward.5} parent=5 // pred_check_branch
      %1268 = sbr.rel (%p1266) target = $region44
    $region43: #{block_forward.5} parent=5 // pred_region
      %s1269 = ssub.s32 %s10, 2
      // Predicated region
      $region45: #{block_forward.5} parent=43 // pred_check
        %p1270 = pneg %p151
      $region46: #{block_forward.5} parent=43 // pred_check_branch
        %1272 = sbr.rel (%p1270) target = $region48
      $region47: #{block_forward.5} parent=43 // pred_region
        %p1273 = scmp.lt.s32.totalorder %s21, 1
        %s1274 = scalar_select %p1273, %s21, 1
        %p1275 = scmp.lt.s32.totalorder %s22, 1
        %s1276 = scalar_select %p1275, %s22, 1
        %s1277 = smul.addr %s1274, 2
        %s1278 = sadd.s32 %s1276, %s1277
        %s1279 = smul.addr %s1278, 8
        %s1280 = scalar_lea.vmem %s4, %s1279
      $region48: #{block_forward.5} parent=43 // pred_fallthru
        _
    $region44: #{block_forward.5} parent=5 // pred_fallthru
      _
  $region6: #{block_forward.5} parent=0 // loop_footer
    %s14 = sadd.s32 1, %s10
  $region7: #{block_forward.5} parent=0 // loop_footer_branch
    %9 = sbr.rel target = $region3
  $region8: #{block_forward.5} parent=0 // loop_exit
    _

</llo_original>
